<compile_context>
chip_gen: v7x
topology: tpu7x:2x2x1
jax: 0.10.0
libtpu: 0.0.40
codegen_flags: <defaults>
</compile_context>

<pallas_src>
import numpy as np
import jax
import jax.numpy as jnp
from jax.experimental import pallas as pl
from jax.experimental.pallas import tpu as pltpu

_LANE = 128


def _round_up(x, m):
    return (x + m - 1) // m * m


def _pad2d(a, rows, cols):
    return jnp.pad(a, ((0, rows - a.shape[0]), (0, cols - a.shape[1])))


# ------------------------------ Fused kernel ------------------------------- #

def _make_fused_kernel(num_layers, num_rels, n):
    """Builds the fused forward kernel for fixed (num_layers, num_rels, N)."""

    def kernel(h_ref, adj_ref, w_fc_ref, *rest):
        layer_refs = rest[:3 * num_layers]           # (w_loop, w_rel, bias)*L
        wd_ref, bd_ref, o_ref = rest[3 * num_layers:]

        adj = adj_ref[...]                           # (R*N, N) bf16, 0/1 exact

        # GATLayer forward: returns fc(h) (attention path is dead; see NOTE).
        x = jnp.dot(h_ref[...], w_fc_ref[...],
                    preferred_element_type=jnp.float32)        # (N, lane) f32

        for li in range(num_layers):                 # small static count
            w_loop_ref = layer_refs[3 * li + 0]
            w_rel_ref = layer_refs[3 * li + 1]       # (R, lane, lane)
            b_ref = layer_refs[3 * li + 2]

            # Self-loop + bias (f32).
            acc = (jnp.dot(x, w_loop_ref[...],
                           preferred_element_type=jnp.float32)
                   + b_ref[...])

            # All-relation neighbourhood aggregation in ONE bf16 matmul:
            #   y[r*N + dst, :] = sum_src adj[r, dst, src] * x[src, :]
            # Adjacency is exact in bf16; only the x operand is rounded.
            y = jnp.dot(adj, x.astype(jnp.bfloat16),
                        preferred_element_type=jnp.float32)    # (R*N, lane)

            # Per-relation output projection of the aggregated messages,
            # reassociated so no in-kernel restack/concat copy is needed.
            for r in range(num_rels):
                acc = acc + jnp.dot(y[r * n:(r + 1) * n, :], w_rel_ref[r],
                                    preferred_element_type=jnp.float32)

            x = jnp.maximum(acc, 0.0)                # RelGraphConv ReLU

        # SumPooling over nodes, then Linear(out_dim, 1).  Padded feature
        # columns stay exactly zero through every layer (zero-padded weights
        # and bias, ReLU(0)=0), so they contribute nothing to the pool.
        pooled = jnp.sum(x, axis=0, keepdims=True)             # (1, lane)
        o_ref[...] = (jnp.dot(pooled, wd_ref[...],
                              preferred_element_type=jnp.float32)
                      + bd_ref[...])

    return kernel


# --------------------------- One-time input packing ------------------------ #

def prepare_inputs(adj, params):
    """One-time packing of graph + weights. Call ONCE, outside the hot path."""
    num_rels, n, _ = adj.shape
    out_dims = [lp["w_loop"].shape[1] for lp in params["layers"]]
    lane = _round_up(max(out_dims + [params["w_fc"].shape[1]]), _LANE)

    packed = {
        # adj_vcat[r*N + dst, src] = adj[r, dst, src]; pure reshape (no
        # transpose), stored bf16 to halve HBM bytes and VMEM footprint.
        "adj_vcat": jnp.asarray(adj, jnp.float32)
                       .reshape(num_rels * n, n).astype(jnp.bfloat16),
        "w_fc": _pad2d(jnp.asarray(params["w_fc"], jnp.float32),
                       params["w_fc"].shape[0], lane),
        "layers": tuple(
            (_pad2d(lp["w_loop"], lane, lane),                     # (lane,lane)
             jnp.stack([_pad2d(lp["w_rel"][r], lane, lane)
                        for r in range(num_rels)]),                # (R,lane,lane)
             _pad2d(lp["bias"], 1, lane))                          # (1,lane)
            for lp in params["layers"]),
        "w_dense": _pad2d(jnp.asarray(params["w_dense"], jnp.float32), lane, 1),
        "b_dense": jnp.asarray(params["b_dense"], jnp.float32),
    }
    return packed


def _vmem_limit_bytes(n, feat_dim, lane, num_rels, num_layers):
    """Actual VMEM footprint of the fully-resident kernel, +30% headroom."""
    adj_b = num_rels * n * n * 2                                   # bf16 adj
    in_b = n * feat_dim * 4 + feat_dim * lane * 4                  # h, w_fc
    w_b = num_layers * ((num_rels + 1) * lane * lane + lane) * 4   # per-layer W
    w_b += (lane + 2) * 4                                          # dense
    # live intermediates: x, acc, y (f32) + bf16 cast of x
    inter_b = (num_rels + 2) * n * lane * 4 + n * lane * 2
    total = adj_b + in_b + w_b + inter_b
    return int(min(max(total * 13 // 10, 16 * 1024 * 1024),
                   96 * 1024 * 1024))


# ------------------------------ Model wrapper ------------------------------ #

def model_forward(h, packed):
    n, feat_dim = h.shape
    adj_vcat = packed["adj_vcat"]
    num_rels = adj_vcat.shape[0] // n
    layers = packed["layers"]
    num_layers = len(layers)
    lane = packed["w_fc"].shape[1]

    inputs = [h, adj_vcat, packed["w_fc"]]
    for (w_loop, w_rel, bias) in layers:
        inputs += [w_loop, w_rel, bias]
    inputs += [packed["w_dense"], packed["b_dense"]]

    vmem = pl.BlockSpec(memory_space=pltpu.MemorySpace.VMEM)
    out = pl.pallas_call(
        _make_fused_kernel(num_layers, num_rels, n),
        out_shape=jax.ShapeDtypeStruct((1, 1), jnp.float32),
        in_specs=[vmem] * len(inputs),
        out_specs=vmem,
        compiler_params=pltpu.CompilerParams(
            vmem_limit_bytes=_vmem_limit_bytes(
                n, feat_dim, lane, num_rels, num_layers)),
    )(*inputs)

    # h.view(N, -1, out_dim) -> SumPooling -> dense -> (1, 1, 1); no sigmoid
    # (classifier=False).
    return out.reshape(1, 1, 1)


def reference_forward(h, adj, params):
    """Exact f32 reference for the module forward."""
    x = h @ params["w_fc"]
    for lp in params["layers"]:
        acc = x @ lp["w_loop"] + lp["bias"]
        for r in range(adj.shape[0]):
            acc = acc + adj[r] @ (x @ lp["w_rel"][r])
        x = jnp.maximum(acc, 0.0)
    pooled = jnp.sum(x, axis=0, keepdims=True)
    return (pooled @ params["w_dense"] + params["b_dense"]).reshape(1, 1, 1)


# --------------------------------- Driver ---------------------------------- #

if __name__ == "__main__":
    # Small, module-consistent shapes.
    num_nodes = 16
    features_dim = 8
    h_dim = 16
    out_dim = 16
    num_rels = 3
    num_hidden_layers = 2

    key = jax.random.PRNGKey(0)
    keys = jax.random.split(key, 16)

    # Deterministic synthetic graph: each node i has edges i->(i+1)%N (rel i%R)
    # and i->(i+2)%N (rel (i+1)%R).
    adj_np = np.zeros((num_rels, num_nodes, num_nodes), dtype=np.float32)
    for i in range(num_nodes):
        for k, hop in enumerate((1, 2)):
            adj_np[(i + k) % num_rels, (i + hop) % num_nodes, i] = 1.0
    adj = jnp.asarray(adj_np)

    # Node features.
    h = jax.random.normal(keys[0], (num_nodes, features_dim), dtype=jnp.float32)

    # Deterministic parameters (nn.Linear weights stored pre-transposed (in, out)).
    params = {
        "w_fc": 0.1 * jax.random.normal(keys[1], (features_dim, h_dim), jnp.float32),
        "layers": [],
        "w_dense": 0.1 * jax.random.normal(keys[2], (out_dim, 1), jnp.float32),
        "b_dense": 0.1 * jax.random.normal(keys[3], (1, 1), jnp.float32),
    }
    layer_dims = [(h_dim, h_dim)] * num_hidden_layers + [(h_dim, out_dim)]
    for li, (din, dout) in enumerate(layer_dims):
        kk = jax.random.split(keys[4 + li], 3)
        params["layers"].append(
            {
                "w_rel": 0.1 * jax.random.normal(kk[0], (num_rels, din, dout), jnp.float32),
                "w_loop": 0.1 * jax.random.normal(kk[1], (din, dout), jnp.float32),
                "bias": 0.1 * jax.random.normal(kk[2], (1, dout), jnp.float32),
            }
        )

    # One-time packing (adjacency repack + weight padding) outside the hot path.
    packed = jax.tree_util.tree_map(jax.block_until_ready, prepare_inputs(adj, params))

    fwd = jax.jit(model_forward)
    out = jax.block_until_ready(fwd(h, packed))
    ref = jax.block_until_ready(reference_forward(h, adj, params))

    assert out.shape == (1, 1, 1), out.shape
    # Tolerance covers the intentional bf16 rounding of the aggregation
    # operands (adjacency 0/1 is exact; only x is rounded, f32 accumulate).
    np.testing.assert_allclose(np.asarray(out), np.asarray(ref),
                               rtol=3e-2, atol=1e-2)
    print("KERNEL_OK")
</pallas_src>

<mosaic_0001>
module attributes {stable_mosaic.version = 11 : i64} {
  func.func @kernel(%arg0: memref<16x8xf32, #tpu.memory_space<vmem>>, %arg1: memref<48x16xbf16, #tpu.memory_space<vmem>>, %arg2: memref<8x128xf32, #tpu.memory_space<vmem>>, %arg3: memref<128x128xf32, #tpu.memory_space<vmem>>, %arg4: memref<3x128x128xf32, #tpu.memory_space<vmem>>, %arg5: memref<1x128xf32, #tpu.memory_space<vmem>>, %arg6: memref<128x128xf32, #tpu.memory_space<vmem>>, %arg7: memref<3x128x128xf32, #tpu.memory_space<vmem>>, %arg8: memref<1x128xf32, #tpu.memory_space<vmem>>, %arg9: memref<128x128xf32, #tpu.memory_space<vmem>>, %arg10: memref<3x128x128xf32, #tpu.memory_space<vmem>>, %arg11: memref<1x128xf32, #tpu.memory_space<vmem>>, %arg12: memref<128x1xf32, #tpu.memory_space<vmem>>, %arg13: memref<1x1xf32, #tpu.memory_space<vmem>>, %arg14: memref<1x1xf32, #tpu.memory_space<vmem>>) attributes {dimension_semantics = [], scalar_prefetch = 0 : i64, scratch_operands = 0 : i64, tpu.core_type = #tpu.core_type<tc>} {
    %c0 = arith.constant 0 : index
    %c0_0 = arith.constant 0 : index
    %0 = vector.load %arg1[%c0, %c0_0] : memref<48x16xbf16, #tpu.memory_space<vmem>>, vector<48x16xbf16>
    %c0_1 = arith.constant 0 : index
    %c0_2 = arith.constant 0 : index
    %1 = vector.load %arg0[%c0_1, %c0_2] : memref<16x8xf32, #tpu.memory_space<vmem>>, vector<16x8xf32>
    %c0_3 = arith.constant 0 : index
    %c0_4 = arith.constant 0 : index
    %2 = vector.load %arg2[%c0_3, %c0_4] : memref<8x128xf32, #tpu.memory_space<vmem>>, vector<8x128xf32>
    %cst = arith.constant dense<0.000000e+00> : vector<16x128xf32>
    %3 = tpu.matmul %1, %2, %cst {dimension_numbers = #tpu.dot_dimension_numbers<[1], [0], [0], [1], [0, 0, 1, 1], [], []>} : vector<16x8xf32>, vector<8x128xf32>, vector<16x128xf32> -> vector<16x128xf32>
    %c0_5 = arith.constant 0 : index
    %c0_6 = arith.constant 0 : index
    %4 = vector.load %arg3[%c0_5, %c0_6] : memref<128x128xf32, #tpu.memory_space<vmem>>, vector<128x128xf32>
    %cst_7 = arith.constant dense<0.000000e+00> : vector<16x128xf32>
    %5 = tpu.matmul %3, %4, %cst_7 {dimension_numbers = #tpu.dot_dimension_numbers<[1], [0], [0], [1], [0, 0, 1, 1], [], []>} : vector<16x128xf32>, vector<128x128xf32>, vector<16x128xf32> -> vector<16x128xf32>
    %c0_8 = arith.constant 0 : index
    %c0_9 = arith.constant 0 : index
    %6 = vector.load %arg5[%c0_8, %c0_9] : memref<1x128xf32, #tpu.memory_space<vmem>>, vector<1x128xf32>
    %7 = vector.broadcast %6 : vector<1x128xf32> to vector<16x128xf32>
    %8 = arith.addf %5, %7 : vector<16x128xf32>
    %9 = arith.truncf %3 : vector<16x128xf32> to vector<16x128xbf16>
    %cst_10 = arith.constant dense<0.000000e+00> : vector<48x128xf32>
    %10 = tpu.matmul %0, %9, %cst_10 {dimension_numbers = #tpu.dot_dimension_numbers<[1], [0], [0], [1], [0, 0, 1, 1], [], []>} : vector<48x16xbf16>, vector<16x128xbf16>, vector<48x128xf32> -> vector<48x128xf32>
    %11 = vector.extract_strided_slice %10 {offsets = [0, 0], sizes = [16, 128], strides = [1, 1]} : vector<48x128xf32> to vector<16x128xf32>
    %c0_11 = arith.constant 0 : index
    %c0_12 = arith.constant 0 : index
    %c0_13 = arith.constant 0 : index
    %12 = vector.load %arg4[%c0_11, %c0_12, %c0_13] : memref<3x128x128xf32, #tpu.memory_space<vmem>>, vector<1x128x128xf32>
    %13 = vector.shape_cast %12 : vector<1x128x128xf32> to vector<128x128xf32>
    %cst_14 = arith.constant dense<0.000000e+00> : vector<16x128xf32>
    %14 = tpu.matmul %11, %13, %cst_14 {dimension_numbers = #tpu.dot_dimension_numbers<[1], [0], [0], [1], [0, 0, 1, 1], [], []>} : vector<16x128xf32>, vector<128x128xf32>, vector<16x128xf32> -> vector<16x128xf32>
    %15 = arith.addf %8, %14 : vector<16x128xf32>
    %16 = vector.extract_strided_slice %10 {offsets = [16, 0], sizes = [16, 128], strides = [1, 1]} : vector<48x128xf32> to vector<16x128xf32>
    %c1 = arith.constant 1 : index
    %c0_15 = arith.constant 0 : index
    %c0_16 = arith.constant 0 : index
    %17 = vector.load %arg4[%c1, %c0_15, %c0_16] : memref<3x128x128xf32, #tpu.memory_space<vmem>>, vector<1x128x128xf32>
    %18 = vector.shape_cast %17 : vector<1x128x128xf32> to vector<128x128xf32>
    %cst_17 = arith.constant dense<0.000000e+00> : vector<16x128xf32>
    %19 = tpu.matmul %16, %18, %cst_17 {dimension_numbers = #tpu.dot_dimension_numbers<[1], [0], [0], [1], [0, 0, 1, 1], [], []>} : vector<16x128xf32>, vector<128x128xf32>, vector<16x128xf32> -> vector<16x128xf32>
    %20 = arith.addf %15, %19 : vector<16x128xf32>
    %21 = vector.extract_strided_slice %10 {offsets = [32, 0], sizes = [16, 128], strides = [1, 1]} : vector<48x128xf32> to vector<16x128xf32>
    %c2 = arith.constant 2 : index
    %c0_18 = arith.constant 0 : index
    %c0_19 = arith.constant 0 : index
    %22 = vector.load %arg4[%c2, %c0_18, %c0_19] : memref<3x128x128xf32, #tpu.memory_space<vmem>>, vector<1x128x128xf32>
    %23 = vector.shape_cast %22 : vector<1x128x128xf32> to vector<128x128xf32>
    %cst_20 = arith.constant dense<0.000000e+00> : vector<16x128xf32>
    %24 = tpu.matmul %21, %23, %cst_20 {dimension_numbers = #tpu.dot_dimension_numbers<[1], [0], [0], [1], [0, 0, 1, 1], [], []>} : vector<16x128xf32>, vector<128x128xf32>, vector<16x128xf32> -> vector<16x128xf32>
    %25 = arith.addf %20, %24 : vector<16x128xf32>
    %cst_21 = arith.constant 0.000000e+00 : f32
    %26 = vector.broadcast %cst_21 : f32 to vector<16x128xf32>
    %27 = arith.maximumf %25, %26 : vector<16x128xf32>
    %c0_22 = arith.constant 0 : index
    %c0_23 = arith.constant 0 : index
    %28 = vector.load %arg6[%c0_22, %c0_23] : memref<128x128xf32, #tpu.memory_space<vmem>>, vector<128x128xf32>
    %cst_24 = arith.constant dense<0.000000e+00> : vector<16x128xf32>
    %29 = tpu.matmul %27, %28, %cst_24 {dimension_numbers = #tpu.dot_dimension_numbers<[1], [0], [0], [1], [0, 0, 1, 1], [], []>} : vector<16x128xf32>, vector<128x128xf32>, vector<16x128xf32> -> vector<16x128xf32>
    %c0_25 = arith.constant 0 : index
    %c0_26 = arith.constant 0 : index
    %30 = vector.load %arg8[%c0_25, %c0_26] : memref<1x128xf32, #tpu.memory_space<vmem>>, vector<1x128xf32>
    %31 = vector.broadcast %30 : vector<1x128xf32> to vector<16x128xf32>
    %32 = arith.addf %29, %31 : vector<16x128xf32>
    %33 = arith.truncf %27 : vector<16x128xf32> to vector<16x128xbf16>
    %cst_27 = arith.constant dense<0.000000e+00> : vector<48x128xf32>
    %34 = tpu.matmul %0, %33, %cst_27 {dimension_numbers = #tpu.dot_dimension_numbers<[1], [0], [0], [1], [0, 0, 1, 1], [], []>} : vector<48x16xbf16>, vector<16x128xbf16>, vector<48x128xf32> -> vector<48x128xf32>
    %35 = vector.extract_strided_slice %34 {offsets = [0, 0], sizes = [16, 128], strides = [1, 1]} : vector<48x128xf32> to vector<16x128xf32>
    %c0_28 = arith.constant 0 : index
    %c0_29 = arith.constant 0 : index
    %c0_30 = arith.constant 0 : index
    %36 = vector.load %arg7[%c0_28, %c0_29, %c0_30] : memref<3x128x128xf32, #tpu.memory_space<vmem>>, vector<1x128x128xf32>
    %37 = vector.shape_cast %36 : vector<1x128x128xf32> to vector<128x128xf32>
    %cst_31 = arith.constant dense<0.000000e+00> : vector<16x128xf32>
    %38 = tpu.matmul %35, %37, %cst_31 {dimension_numbers = #tpu.dot_dimension_numbers<[1], [0], [0], [1], [0, 0, 1, 1], [], []>} : vector<16x128xf32>, vector<128x128xf32>, vector<16x128xf32> -> vector<16x128xf32>
    %39 = arith.addf %32, %38 : vector<16x128xf32>
    %40 = vector.extract_strided_slice %34 {offsets = [16, 0], sizes = [16, 128], strides = [1, 1]} : vector<48x128xf32> to vector<16x128xf32>
    %c1_32 = arith.constant 1 : index
    %c0_33 = arith.constant 0 : index
    %c0_34 = arith.constant 0 : index
    %41 = vector.load %arg7[%c1_32, %c0_33, %c0_34] : memref<3x128x128xf32, #tpu.memory_space<vmem>>, vector<1x128x128xf32>
    %42 = vector.shape_cast %41 : vector<1x128x128xf32> to vector<128x128xf32>
    %cst_35 = arith.constant dense<0.000000e+00> : vector<16x128xf32>
    %43 = tpu.matmul %40, %42, %cst_35 {dimension_numbers = #tpu.dot_dimension_numbers<[1], [0], [0], [1], [0, 0, 1, 1], [], []>} : vector<16x128xf32>, vector<128x128xf32>, vector<16x128xf32> -> vector<16x128xf32>
    %44 = arith.addf %39, %43 : vector<16x128xf32>
    %45 = vector.extract_strided_slice %34 {offsets = [32, 0], sizes = [16, 128], strides = [1, 1]} : vector<48x128xf32> to vector<16x128xf32>
    %c2_36 = arith.constant 2 : index
    %c0_37 = arith.constant 0 : index
    %c0_38 = arith.constant 0 : index
    %46 = vector.load %arg7[%c2_36, %c0_37, %c0_38] : memref<3x128x128xf32, #tpu.memory_space<vmem>>, vector<1x128x128xf32>
    %47 = vector.shape_cast %46 : vector<1x128x128xf32> to vector<128x128xf32>
    %cst_39 = arith.constant dense<0.000000e+00> : vector<16x128xf32>
    %48 = tpu.matmul %45, %47, %cst_39 {dimension_numbers = #tpu.dot_dimension_numbers<[1], [0], [0], [1], [0, 0, 1, 1], [], []>} : vector<16x128xf32>, vector<128x128xf32>, vector<16x128xf32> -> vector<16x128xf32>
    %49 = arith.addf %44, %48 : vector<16x128xf32>
    %cst_40 = arith.constant 0.000000e+00 : f32
    %50 = vector.broadcast %cst_40 : f32 to vector<16x128xf32>
    %51 = arith.maximumf %49, %50 : vector<16x128xf32>
    %c0_41 = arith.constant 0 : index
    %c0_42 = arith.constant 0 : index
    %52 = vector.load %arg9[%c0_41, %c0_42] : memref<128x128xf32, #tpu.memory_space<vmem>>, vector<128x128xf32>
    %cst_43 = arith.constant dense<0.000000e+00> : vector<16x128xf32>
    %53 = tpu.matmul %51, %52, %cst_43 {dimension_numbers = #tpu.dot_dimension_numbers<[1], [0], [0], [1], [0, 0, 1, 1], [], []>} : vector<16x128xf32>, vector<128x128xf32>, vector<16x128xf32> -> vector<16x128xf32>
    %c0_44 = arith.constant 0 : index
    %c0_45 = arith.constant 0 : index
    %54 = vector.load %arg11[%c0_44, %c0_45] : memref<1x128xf32, #tpu.memory_space<vmem>>, vector<1x128xf32>
    %55 = vector.broadcast %54 : vector<1x128xf32> to vector<16x128xf32>
    %56 = arith.addf %53, %55 : vector<16x128xf32>
    %57 = arith.truncf %51 : vector<16x128xf32> to vector<16x128xbf16>
    %cst_46 = arith.constant dense<0.000000e+00> : vector<48x128xf32>
    %58 = tpu.matmul %0, %57, %cst_46 {dimension_numbers = #tpu.dot_dimension_numbers<[1], [0], [0], [1], [0, 0, 1, 1], [], []>} : vector<48x16xbf16>, vector<16x128xbf16>, vector<48x128xf32> -> vector<48x128xf32>
    %59 = vector.extract_strided_slice %58 {offsets = [0, 0], sizes = [16, 128], strides = [1, 1]} : vector<48x128xf32> to vector<16x128xf32>
    %c0_47 = arith.constant 0 : index
    %c0_48 = arith.constant 0 : index
    %c0_49 = arith.constant 0 : index
    %60 = vector.load %arg10[%c0_47, %c0_48, %c0_49] : memref<3x128x128xf32, #tpu.memory_space<vmem>>, vector<1x128x128xf32>
    %61 = vector.shape_cast %60 : vector<1x128x128xf32> to vector<128x128xf32>
    %cst_50 = arith.constant dense<0.000000e+00> : vector<16x128xf32>
    %62 = tpu.matmul %59, %61, %cst_50 {dimension_numbers = #tpu.dot_dimension_numbers<[1], [0], [0], [1], [0, 0, 1, 1], [], []>} : vector<16x128xf32>, vector<128x128xf32>, vector<16x128xf32> -> vector<16x128xf32>
    %63 = arith.addf %56, %62 : vector<16x128xf32>
    %64 = vector.extract_strided_slice %58 {offsets = [16, 0], sizes = [16, 128], strides = [1, 1]} : vector<48x128xf32> to vector<16x128xf32>
    %c1_51 = arith.constant 1 : index
    %c0_52 = arith.constant 0 : index
    %c0_53 = arith.constant 0 : index
    %65 = vector.load %arg10[%c1_51, %c0_52, %c0_53] : memref<3x128x128xf32, #tpu.memory_space<vmem>>, vector<1x128x128xf32>
    %66 = vector.shape_cast %65 : vector<1x128x128xf32> to vector<128x128xf32>
    %cst_54 = arith.constant dense<0.000000e+00> : vector<16x128xf32>
    %67 = tpu.matmul %64, %66, %cst_54 {dimension_numbers = #tpu.dot_dimension_numbers<[1], [0], [0], [1], [0, 0, 1, 1], [], []>} : vector<16x128xf32>, vector<128x128xf32>, vector<16x128xf32> -> vector<16x128xf32>
    %68 = arith.addf %63, %67 : vector<16x128xf32>
    %69 = vector.extract_strided_slice %58 {offsets = [32, 0], sizes = [16, 128], strides = [1, 1]} : vector<48x128xf32> to vector<16x128xf32>
    %c2_55 = arith.constant 2 : index
    %c0_56 = arith.constant 0 : index
    %c0_57 = arith.constant 0 : index
    %70 = vector.load %arg10[%c2_55, %c0_56, %c0_57] : memref<3x128x128xf32, #tpu.memory_space<vmem>>, vector<1x128x128xf32>
    %71 = vector.shape_cast %70 : vector<1x128x128xf32> to vector<128x128xf32>
    %cst_58 = arith.constant dense<0.000000e+00> : vector<16x128xf32>
    %72 = tpu.matmul %69, %71, %cst_58 {dimension_numbers = #tpu.dot_dimension_numbers<[1], [0], [0], [1], [0, 0, 1, 1], [], []>} : vector<16x128xf32>, vector<128x128xf32>, vector<16x128xf32> -> vector<16x128xf32>
    %73 = arith.addf %68, %72 : vector<16x128xf32>
    %cst_59 = arith.constant 0.000000e+00 : f32
    %74 = vector.broadcast %cst_59 : f32 to vector<16x128xf32>
    %75 = arith.maximumf %73, %74 : vector<16x128xf32>
    %cst_60 = arith.constant dense<0.000000e+00> : vector<128xf32>
    %76 = vector.multi_reduction <add>, %75, %cst_60 [0] : vector<16x128xf32> to vector<128xf32>
    %77 = vector.shape_cast %76 : vector<128xf32> to vector<1x128xf32>
    %c0_61 = arith.constant 0 : index
    %c0_62 = arith.constant 0 : index
    %78 = vector.load %arg12[%c0_61, %c0_62] : memref<128x1xf32, #tpu.memory_space<vmem>>, vector<128x1xf32>
    %cst_63 = arith.constant dense<0.000000e+00> : vector<1x1xf32>
    %79 = tpu.matmul %77, %78, %cst_63 {dimension_numbers = #tpu.dot_dimension_numbers<[1], [0], [0], [1], [0, 0, 1, 1], [], []>} : vector<1x128xf32>, vector<128x1xf32>, vector<1x1xf32> -> vector<1x1xf32>
    %c0_64 = arith.constant 0 : index
    %c0_65 = arith.constant 0 : index
    %80 = vector.load %arg13[%c0_64, %c0_65] : memref<1x1xf32, #tpu.memory_space<vmem>>, vector<1x1xf32>
    %81 = arith.addf %79, %80 : vector<1x1xf32>
    %c0_66 = arith.constant 0 : index
    %c0_67 = arith.constant 0 : index
    %82 = vector.load %arg14[%c0_66, %c0_67] : memref<1x1xf32, #tpu.memory_space<vmem>>, vector<1x1xf32>
    tpu.vector_store %arg14[%c0_66, %c0_67], %81 {strides = array<i32>} : memref<1x1xf32, #tpu.memory_space<vmem>>, vector<1x1xf32>,
    return
  }
}

</mosaic_0001>

<llo_original>
// kernel: model_forward.1
$region0: #{model_forward.1}
  #allocation0 [shape = 'u32[]', space=smem, size = 0x4, offset = 0x4, fixed_abs, tag = 'smem constant byte address 0x4 - core index']
  #allocation1 [shape = 'u32[144,128]{1,0:T(1,128)}', space=vmem, size = 0x12000, scoped, tag = 'internal scratch']
  #allocation2 [shape = 'f32[1,1]{1,0:T(1,128)S(1)}', space=vmem, size = 0x200, scoped, tag = 'scoped memory for model_forward.1']
  %s0 = inlined_call_operand.vmem [shape: f32[16,8], index: 0, kind: input, shape index: {}]
  %s1 = inlined_call_operand.vmem [shape: bf16[48,16], index: 1, kind: input, shape index: {}]
  %s2 = inlined_call_operand.vmem [shape: f32[8,128], index: 2, kind: input, shape index: {}]
  %s3 = inlined_call_operand.vmem [shape: f32[128,128], index: 3, kind: input, shape index: {}]
  %s4 = inlined_call_operand.hbm [shape: f32[3,128,128], index: 4, kind: input, shape index: {}]
  %s5 = inlined_call_operand.vmem [shape: f32[1,128], index: 5, kind: input, shape index: {}]
  %s6 = inlined_call_operand.hbm [shape: f32[128,128], index: 6, kind: input, shape index: {}]
  %s7 = inlined_call_operand.hbm [shape: f32[3,128,128], index: 7, kind: input, shape index: {}]
  %s8 = inlined_call_operand.vmem [shape: f32[1,128], index: 8, kind: input, shape index: {}]
  %s9 = inlined_call_operand.hbm [shape: f32[128,128], index: 9, kind: input, shape index: {}]
  %s10 = inlined_call_operand.hbm [shape: f32[3,128,128], index: 10, kind: input, shape index: {}]
  %s11 = inlined_call_operand.vmem [shape: f32[1,128], index: 11, kind: input, shape index: {}]
  %s12 = inlined_call_operand.vmem [shape: f32[128,1], index: 12, kind: input, shape index: {}]
  %s13 = inlined_call_operand.<no memory space> [shape: f32[1,1], index: 13, kind: input, shape index: {}]
  %s14 = inlined_call_operand.hbm [shape: f32[1,1], index: 14, kind: output, shape index: {}]
  %s15 = sld [smem:[#allocation0]]
  $region86: #{model_forward.1} parent=0
    _
  %s17 = ssub.s32 1, %s15
  %s18 = scalar_select 0, %s17, %s15
  %v19 = vstv %s13
  %20 = vst [vmem:[#allocation2] sm:$0x1] %v19
  $region1: #{model_forward.1} parent=0
    #allocation3 [shape = 'u8[196608]{0}', space=vmem, size = 0x30000, scoped, tag = 'input window, operand 4, single buffered']
    #allocation4 [shape = 's32[1]{0}', space=sflag, size = 0x4, scoped, tag = 'scoped memory for model_forward.1']
    #allocation5 [shape = 's32[1]{0}', space=sflag, size = 0x4, scoped, tag = 'scoped memory for model_forward.1']
    #allocation6 [shape = 'u8[65536]{0}', space=vmem, size = 0x10000, scoped, tag = 'input window, operand 6, single buffered']
    #allocation7 [shape = 's32[1]{0}', space=sflag, size = 0x4, scoped, tag = 'scoped memory for model_forward.1']
    #allocation8 [shape = 'u8[196608]{0}', space=vmem, size = 0x30000, scoped, tag = 'input window, operand 7, single buffered']
    #allocation9 [shape = 'u8[65536]{0}', space=vmem, size = 0x10000, scoped, tag = 'input window, operand 9, single buffered']
    #allocation10 [shape = 's32[1]{0}', space=sflag, size = 0x4, scoped, tag = 'scoped memory for model_forward.1']
    #allocation11 [shape = 'u8[196608]{0}', space=vmem, size = 0x30000, scoped, tag = 'input window, operand 10, single buffered']
    #allocation12 [shape = 'u8[512]{0}', space=vmem, size = 0x400, scoped, tag = 'output window, operand 0, single buffered']
    %21 = vsyncpa [#allocation4], 0
    %22 = vsyncpa [#allocation7], 0
    %23 = vsyncpa [#allocation10], 0
    %24 = vsyncpa [#allocation5], 0
    // Predicated region
    $region2: #{model_forward.1} parent=1 // pred_check
      _
    $region3: #{model_forward.1} parent=1 // pred_check_branch
      %26 = sbr.rel (0) target = $region5
    $region4: #{model_forward.1} parent=1 // pred_region
      _
    $region5: #{model_forward.1} parent=1 // pred_fallthru
      _
    // Predicated region
    $region6: #{model_forward.1} parent=1 // pred_check
      _
    $region7: #{model_forward.1} parent=1 // pred_check_branch
      %28 = sbr.rel (0) target = $region9
    $region8: #{model_forward.1} parent=1 // pred_region
      _
    $region9: #{model_forward.1} parent=1 // pred_fallthru
      _
    // Predicated region
    $region10: #{model_forward.1} parent=1 // pred_check
      _
    $region11: #{model_forward.1} parent=1 // pred_check_branch
      %30 = sbr.rel (0) target = $region13
    $region12: #{model_forward.1} parent=1 // pred_region
      _
    $region13: #{model_forward.1} parent=1 // pred_fallthru
      _
    // Predicated region
    $region14: #{model_forward.1} parent=1 // pred_check
      _
    $region15: #{model_forward.1} parent=1 // pred_check_branch
      %32 = sbr.rel (0) target = $region17
    $region16: #{model_forward.1} parent=1 // pred_region
      _
    $region17: #{model_forward.1} parent=1 // pred_fallthru
      _
    // Predicated region
    $region18: #{model_forward.1} parent=1 // pred_check
      _
    $region19: #{model_forward.1} parent=1 // pred_check_branch
      %34 = sbr.rel (0) target = $region21
    $region20: #{model_forward.1} parent=1 // pred_region
      %s36 = ssub.s32 6144, 6144
      %37 = vsyncadd [#allocation4], %s36
      %s38 = sshll.u32 [#allocation3], 4
      %s39 = int_to_ptr.vmem [resolvable:$true] %s38
      %44 = dma.hbm_to_vmem [thread:$0]  %s4, 6144, %s39, [#allocation4], 128, 128, 8
    $region21: #{model_forward.1} parent=1 // pred_fallthru
      _
    // Predicated region
    $region22: #{model_forward.1} parent=1 // pred_check
      _
    $region23: #{model_forward.1} parent=1 // pred_check_branch
      %46 = sbr.rel (0) target = $region25
    $region24: #{model_forward.1} parent=1 // pred_region
      _
    $region25: #{model_forward.1} parent=1 // pred_fallthru
      _
    // Predicated region
    $region26: #{model_forward.1} parent=1 // pred_check
      _
    $region27: #{model_forward.1} parent=1 // pred_check_branch
      %48 = sbr.rel (0) target = $region29
    $region28: #{model_forward.1} parent=1 // pred_region
      %s50 = ssub.s32 2048, 2048
      %51 = vsyncadd [#allocation7], %s50
      %s52 = sshll.u32 [#allocation6], 4
      %s53 = int_to_ptr.vmem [resolvable:$true] %s52
      %58 = dma.hbm_to_vmem [thread:$0]  %s6, 2048, %s53, [#allocation7], 128, 128, 8
    $region29: #{model_forward.1} parent=1 // pred_fallthru
      _
    // Predicated region
    $region30: #{model_forward.1} parent=1 // pred_check
      _
    $region31: #{model_forward.1} parent=1 // pred_check_branch
      %60 = sbr.rel (0) target = $region33
    $region32: #{model_forward.1} parent=1 // pred_region
      %s62 = ssub.s32 6144, 6144
      %63 = vsyncadd [#allocation7], %s62
      %s64 = sshll.u32 [#allocation8], 4
      %s65 = int_to_ptr.vmem [resolvable:$true] %s64
      %70 = dma.hbm_to_vmem [thread:$0]  %s7, 6144, %s65, [#allocation7], 128, 128, 8
    $region33: #{model_forward.1} parent=1 // pred_fallthru
      _
    // Predicated region
    $region34: #{model_forward.1} parent=1 // pred_check
      _
    $region35: #{model_forward.1} parent=1 // pred_check_branch
      %72 = sbr.rel (0) target = $region37
    $region36: #{model_forward.1} parent=1 // pred_region
      _
    $region37: #{model_forward.1} parent=1 // pred_fallthru
      _
    // Predicated region
    $region38: #{model_forward.1} parent=1 // pred_check
      _
    $region39: #{model_forward.1} parent=1 // pred_check_branch
      %74 = sbr.rel (0) target = $region41
    $region40: #{model_forward.1} parent=1 // pred_region
      %s76 = ssub.s32 2048, 2048
      %77 = vsyncadd [#allocation10], %s76
      %s78 = sshll.u32 [#allocation9], 4
      %s79 = int_to_ptr.vmem [resolvable:$true] %s78
      %84 = dma.hbm_to_vmem [thread:$0]  %s9, 2048, %s79, [#allocation10], 128, 128, 8
    $region41: #{model_forward.1} parent=1 // pred_fallthru
      _
    // Predicated region
    $region42: #{model_forward.1} parent=1 // pred_check
      _
    $region43: #{model_forward.1} parent=1 // pred_check_branch
      %86 = sbr.rel (0) target = $region45
    $region44: #{model_forward.1} parent=1 // pred_region
      %s88 = ssub.s32 6144, 6144
      %89 = vsyncadd [#allocation10], %s88
      %s90 = sshll.u32 [#allocation11], 4
      %s91 = int_to_ptr.vmem [resolvable:$true] %s90
      %96 = dma.hbm_to_vmem [thread:$0]  %s10, 6144, %s91, [#allocation10], 128, 128, 8
    $region45: #{model_forward.1} parent=1 // pred_fallthru
      _
    // Predicated region
    $region46: #{model_forward.1} parent=1 // pred_check
      _
    $region47: #{model_forward.1} parent=1 // pred_check_branch
      %98 = sbr.rel (0) target = $region49
    $region48: #{model_forward.1} parent=1 // pred_region
      _
    $region49: #{model_forward.1} parent=1 // pred_fallthru
      _
    // Predicated region
    $region50: #{model_forward.1} parent=1 // pred_check
      _
    $region51: #{model_forward.1} parent=1 // pred_check_branch
      %100 = sbr.rel (0) target = $region53
    $region52: #{model_forward.1} parent=1 // pred_region
      _
    $region53: #{model_forward.1} parent=1 // pred_fallthru
      _
    // Predicated region
    $region54: #{model_forward.1} parent=1 // pred_check
      _
    $region55: #{model_forward.1} parent=1 // pred_check_branch
      %102 = sbr.rel (0) target = $region57
    $region56: #{model_forward.1} parent=1 // pred_region
      _
    $region57: #{model_forward.1} parent=1 // pred_fallthru
      _
    // Predicated region
    $region58: #{model_forward.1} parent=1 // pred_check
      _
    $region59: #{model_forward.1} parent=1 // pred_check_branch
      %104 = sbr.rel (0) target = $region61
    $region60: #{model_forward.1} parent=1 // pred_region
      %105 = dma.done [#allocation4], 6144
    $region61: #{model_forward.1} parent=1 // pred_fallthru
      _
    // Predicated region
    $region62: #{model_forward.1} parent=1 // pred_check
      _
    $region63: #{model_forward.1} parent=1 // pred_check_branch
      %107 = sbr.rel (0) target = $region65
    $region64: #{model_forward.1} parent=1 // pred_region
      %108 = dma.done [#allocation7], 2048
    $region65: #{model_forward.1} parent=1 // pred_fallthru
      _
    // Predicated region
    $region66: #{model_forward.1} parent=1 // pred_check
      _
    $region67: #{model_forward.1} parent=1 // pred_check_branch
      %110 = sbr.rel (0) target = $region69
    $region68: #{model_forward.1} parent=1 // pred_region
      %111 = dma.done [#allocation7], 6144
    $region69: #{model_forward.1} parent=1 // pred_fallthru
      _
    // Predicated region
    $region70: #{model_forward.1} parent=1 // pred_check
      _
    $region71: #{model_forward.1} parent=1 // pred_check_branch
      %113 = sbr.rel (0) target = $region73
    $region72: #{model_forward.1} parent=1 // pred_region
      %114 = dma.done [#allocation10], 2048
    $region73: #{model_forward.1} parent=1 // pred_fallthru
      _
    // Predicated region
    $region74: #{model_forward.1} parent=1 // pred_check
      _
    $region75: #{model_forward.1} parent=1 // pred_check_branch
      %116 = sbr.rel (0) target = $region77
    $region76: #{model_forward.1} parent=1 // pred_region
      %117 = dma.done [#allocation10], 6144
    $region77: #{model_forward.1} parent=1 // pred_fallthru
      _
    %v119 = vld [vmem:[%s1] sm:$0xf]
    %v120 = vld [vmem:[%s1 + $0x4] sm:$0xf]
    %v121 = vld [vmem:[%s1 + $0x8] sm:$0xf]
    %v122 = vld [vmem:[%s1 + $0xc] sm:$0xf]
    %v123 = vld [vmem:[%s1 + $0x10] sm:$0xf]
    %v124 = vld [vmem:[%s1 + $0x14] sm:$0xf]
    %v125 = vld [vmem:[%s0] sm:$0xff]
    %v126 = vld [vmem:[%s0 + $0x8] sm:$0xff]
    %v127 = vld [vmem:[%s2] sm:$0xff]
    %vm128 = vcmask 64512
    %v130 = vsel %vm128, %v125, 0
    %v133 = vsel %vm128, %v126, 0
    %135 = vmatprep.subr.mxu0 0.0
    %136 = vmatpush1.msra.mxu0 %v127
    %137 = vmatprep.subr.mxu0 0.0
    %138 = vmatpush1.msra.mxu0 0.0
    %139 = vmatprep.subr.mxu0 0.0
    %140 = vmatpush1.msra.mxu0 0.0
    %141 = vmatprep.subr.mxu0 0.0
    %142 = vmatpush1.msra.mxu0 0.0
    %143 = vmatprep.subr.mxu0 0.0
    %144 = vmatpush1.msra.mxu0 0.0
    %145 = vmatprep.subr.mxu0 0.0
    %146 = vmatpush1.msra.mxu0 0.0
    %147 = vmatprep.subr.mxu0 0.0
    %148 = vmatpush1.msra.mxu0 0.0
    %149 = vmatprep.subr.mxu0 0.0
    %150 = vmatpush1.msra.mxu0 0.0
    %151 = vmatprep.subr.mxu0 0.0
    %152 = vmatpush1.msra.mxu0 0.0
    %153 = vmatprep.subr.mxu0 0.0
    %154 = vmatpush1.msra.mxu0 0.0
    %155 = vmatprep.subr.mxu0 0.0
    %156 = vmatpush1.msra.mxu0 0.0
    %157 = vmatprep.subr.mxu0 0.0
    %158 = vmatpush1.msra.mxu0 0.0
    %159 = vmatprep.subr.mxu0 0.0
    %160 = vmatpush1.msra.mxu0 0.0
    %161 = vmatprep.subr.mxu0 0.0
    %162 = vmatpush1.msra.mxu0 0.0
    %163 = vmatprep.subr.mxu0 0.0
    %164 = vmatpush1.msra.mxu0 0.0
    %165 = vmatprep.subr.mxu0 0.0
    %166 = vmatpush1.msra.mxu0 0.0
    %167 = vmatprep.subr.mxu0 0.0
    %168 = vmatpush1.msra.mxu0 0.0
    %169 = vmatprep.subr.mxu0 0.0
    %170 = vmatpush1.msra.mxu0 0.0
    %171 = vmatprep.subr.mxu0 0.0
    %172 = vmatpush1.msra.mxu0 0.0
    %173 = vmatprep.subr.mxu0 0.0
    %174 = vmatpush1.msra.mxu0 0.0
    %175 = vmatprep.subr.mxu0 0.0
    %176 = vmatpush1.msra.mxu0 0.0
    %177 = vmatprep.subr.mxu0 0.0
    %178 = vmatpush1.msra.mxu0 0.0
    %179 = vmatprep.subr.mxu0 0.0
    %180 = vmatpush1.msra.mxu0 0.0
    %181 = vmatprep.subr.mxu0 0.0
    %182 = vmatpush1.msra.mxu0 0.0
    %183 = vmatprep.subr.mxu0 0.0
    %184 = vmatpush1.msra.mxu0 0.0
    %185 = vmatprep.subr.mxu0 0.0
    %186 = vmatpush1.msra.mxu0 0.0
    %187 = vmatprep.subr.mxu0 0.0
    %188 = vmatpush1.msra.mxu0 0.0
    %189 = vmatprep.subr.mxu0 0.0
    %190 = vmatpush1.msra.mxu0 0.0
    %191 = vmatprep.subr.mxu0 0.0
    %192 = vmatpush1.msra.mxu0 0.0
    %193 = vmatprep.subr.mxu0 0.0
    %194 = vmatpush1.msra.mxu0 0.0
    %195 = vmatprep.subr.mxu0 0.0
    %196 = vmatpush1.msra.mxu0 0.0
    %197 = vmatprep.subr.mxu0 0.0
    %198 = vmatpush1.msra.mxu0 0.0
    %199 = vmatprep.mubr.f32.mxu0 0.0
    %200 = vmatmul.mubr.f32.gmra.mrb[0].mxu0 %v130
    %v201 = vpop.f32.mrb[0].mxu0
    %v202 = vadd.f32 0.0, %v201
    %v203 = vpop.f32.mrb[0].mxu0
    %204 = vmatprep.mubr.f32.mxu0 0.0
    %205 = vmatmul.mubr.f32.gmra.mrb[0].mxu0 %v133
    %v206 = vpop.f32.mrb[0].mxu0
    %v207 = vadd.f32 0.0, %v206
    %v208 = vpop.f32.mrb[0].mxu0
    %209 = vdwg.mxu0
    %v210 = vld [vmem:[%s3] sm:$0xff]
    %v211 = vld [vmem:[%s3 + $0x8] sm:$0xff]
    %v212 = vld [vmem:[%s3 + $0x10] sm:$0xff]
    %v213 = vld [vmem:[%s3 + $0x18] sm:$0xff]
    %v214 = vld [vmem:[%s3 + $0x20] sm:$0xff]
    %v215 = vld [vmem:[%s3 + $0x28] sm:$0xff]
    %v216 = vld [vmem:[%s3 + $0x30] sm:$0xff]
    %v217 = vld [vmem:[%s3 + $0x38] sm:$0xff]
    %v218 = vld [vmem:[%s3 + $0x40] sm:$0xff]
    %v219 = vld [vmem:[%s3 + $0x48] sm:$0xff]
    %v220 = vld [vmem:[%s3 + $0x50] sm:$0xff]
    %v221 = vld [vmem:[%s3 + $0x58] sm:$0xff]
    %v222 = vld [vmem:[%s3 + $0x60] sm:$0xff]
    %v223 = vld [vmem:[%s3 + $0x68] sm:$0xff]
    %v224 = vld [vmem:[%s3 + $0x70] sm:$0xff]
    %v225 = vld [vmem:[%s3 + $0x78] sm:$0xff]
    %v226 = vld [vmem:[%s5] sm:$0x1]
    %v228 = vlaneseq
    %v229 = vshrl.u32 %v228, 7
    %v230 = vsub.s32 0, %v229
    %v231 = vrot.slane %v226, %v230
    %233 = vmatprep.subr.mxu0 0.0
    %234 = vmatpush1.msra.mxu0 %v210
    %235 = vmatprep.subr.mxu0 0.0
    %236 = vmatpush1.msra.mxu0 %v211
    %237 = vmatprep.subr.mxu0 0.0
    %238 = vmatpush1.msra.mxu0 %v212
    %239 = vmatprep.subr.mxu0 0.0
    %240 = vmatpush1.msra.mxu0 %v213
    %241 = vmatprep.subr.mxu0 0.0
    %242 = vmatpush1.msra.mxu0 %v214
    %243 = vmatprep.subr.mxu0 0.0
    %244 = vmatpush1.msra.mxu0 %v215
    %245 = vmatprep.subr.mxu0 0.0
    %246 = vmatpush1.msra.mxu0 %v216
    %247 = vmatprep.subr.mxu0 0.0
    %248 = vmatpush1.msra.mxu0 %v217
    %249 = vmatprep.subr.mxu0 0.0
    %250 = vmatpush1.msra.mxu0 %v218
    %251 = vmatprep.subr.mxu0 0.0
    %252 = vmatpush1.msra.mxu0 %v219
    %253 = vmatprep.subr.mxu0 0.0
    %254 = vmatpush1.msra.mxu0 %v220
    %255 = vmatprep.subr.mxu0 0.0
    %256 = vmatpush1.msra.mxu0 %v221
    %257 = vmatprep.subr.mxu0 0.0
    %258 = vmatpush1.msra.mxu0 %v222
    %259 = vmatprep.subr.mxu0 0.0
    %260 = vmatpush1.msra.mxu0 %v223
    %261 = vmatprep.subr.mxu0 0.0
    %262 = vmatpush1.msra.mxu0 %v224
    %263 = vmatprep.subr.mxu0 0.0
    %264 = vmatpush1.msra.mxu0 %v225
    %265 = vmatprep.subr.mxu0 0.0
    %266 = vmatpush1.msra.mxu0 0.0
    %267 = vmatprep.subr.mxu0 0.0
    %268 = vmatpush1.msra.mxu0 0.0
    %269 = vmatprep.subr.mxu0 0.0
    %270 = vmatpush1.msra.mxu0 0.0
    %271 = vmatprep.subr.mxu0 0.0
    %272 = vmatpush1.msra.mxu0 0.0
    %273 = vmatprep.subr.mxu0 0.0
    %274 = vmatpush1.msra.mxu0 0.0
    %275 = vmatprep.subr.mxu0 0.0
    %276 = vmatpush1.msra.mxu0 0.0
    %277 = vmatprep.subr.mxu0 0.0
    %278 = vmatpush1.msra.mxu0 0.0
    %279 = vmatprep.subr.mxu0 0.0
    %280 = vmatpush1.msra.mxu0 0.0
    %281 = vmatprep.subr.mxu0 0.0
    %282 = vmatpush1.msra.mxu0 0.0
    %283 = vmatprep.subr.mxu0 0.0
    %284 = vmatpush1.msra.mxu0 0.0
    %285 = vmatprep.subr.mxu0 0.0
    %286 = vmatpush1.msra.mxu0 0.0
    %287 = vmatprep.subr.mxu0 0.0
    %288 = vmatpush1.msra.mxu0 0.0
    %289 = vmatprep.subr.mxu0 0.0
    %290 = vmatpush1.msra.mxu0 0.0
    %291 = vmatprep.subr.mxu0 0.0
    %292 = vmatpush1.msra.mxu0 0.0
    %293 = vmatprep.subr.mxu0 0.0
    %294 = vmatpush1.msra.mxu0 0.0
    %295 = vmatprep.subr.mxu0 0.0
    %296 = vmatpush1.msra.mxu0 0.0
    %297 = vmatprep.mubr.f32.mxu0 0.0
    %298 = vmatmul.mubr.f32.gmra.mrb[0].mxu0 %v202
    %v299 = vpop.f32.mrb[0].mxu0
    %v300 = vadd.f32 %v231, %v299
    %v301 = vpop.f32.mrb[0].mxu0
    %302 = vmatprep.mubr.f32.mxu0 0.0
    %303 = vmatmul.mubr.f32.gmra.mrb[0].mxu0 %v207
    %v304 = vpop.f32.mrb[0].mxu0
    %v305 = vadd.f32 %v231, %v304
    %v306 = vpop.f32.mrb[0].mxu0
    %307 = vdwg.mxu0
    %v308 = vpack.c.bf16 %v207, %v202
    %v315 = vunpack.c.l.b16 %v119
    %v316 = vunpack.c.l.b16 %v120
    %v317 = vunpack.c.l.b16 %v121
    %v318 = vunpack.c.l.b16 %v122
    %v319 = vunpack.c.l.b16 %v123
    %v320 = vunpack.c.l.b16 %v124
    %v321 = vpack.c.b16 %v316, %v315
    %v322 = vpack.c.b16 %v318, %v317
    %v323 = vpack.c.b16 %v320, %v319
    %vm324 = vcmask 130048
    %v326 = vsel %vm324, %v321, 0
    %v329 = vsel %vm324, %v322, 0
    %v332 = vsel %vm324, %v323, 0
    %334 = vmatprep.subr.bf16.mxu0 0
    %335 = vmatpush1.bf16.msra.mxu0 %v308
    %336 = vmatprep.subr.bf16.mxu0 0
    %337 = vmatpush1.bf16.msra.mxu0 0
    %338 = vmatprep.subr.bf16.mxu0 0
    %339 = vmatpush1.bf16.msra.mxu0 0
    %340 = vmatprep.subr.bf16.mxu0 0
    %341 = vmatpush1.bf16.msra.mxu0 0
    %342 = vmatprep.subr.bf16.mxu0 0
    %343 = vmatpush1.bf16.msra.mxu0 0
    %344 = vmatprep.subr.bf16.mxu0 0
    %345 = vmatpush1.bf16.msra.mxu0 0
    %346 = vmatprep.subr.bf16.mxu0 0
    %347 = vmatpush1.bf16.msra.mxu0 0
    %348 = vmatprep.subr.bf16.mxu0 0
    %349 = vmatpush1.bf16.msra.mxu0 0
    %350 = vmatprep.subr.bf16.mxu0 0
    %351 = vmatpush1.bf16.msra.mxu0 0
    %352 = vmatprep.subr.bf16.mxu0 0
    %353 = vmatpush1.bf16.msra.mxu0 0
    %354 = vmatprep.subr.bf16.mxu0 0
    %355 = vmatpush1.bf16.msra.mxu0 0
    %356 = vmatprep.subr.bf16.mxu0 0
    %357 = vmatpush1.bf16.msra.mxu0 0
    %358 = vmatprep.subr.bf16.mxu0 0
    %359 = vmatpush1.bf16.msra.mxu0 0
    %360 = vmatprep.subr.bf16.mxu0 0
    %361 = vmatpush1.bf16.msra.mxu0 0
    %362 = vmatprep.subr.bf16.mxu0 0
    %363 = vmatpush1.bf16.msra.mxu0 0
    %364 = vmatprep.subr.bf16.mxu0 0
    %365 = vmatpush1.bf16.msra.mxu0 0
    %366 = vmatprep.mubr.bf16.mxu0 0
    %367 = vmatmul.mubr.bf16.gmra.mrb[0].mxu0 %v326
    %v368 = vpop.f32.mrb[0].mxu0
    %v369 = vadd.f32 0.0, %v368
    %v370 = vpop.f32.mrb[0].mxu0
    %v371 = vpop.f32.mrb[0].mxu0
    %v372 = vadd.f32 0.0, %v371
    %v373 = vpop.f32.mrb[0].mxu0
    %374 = vmatprep.mubr.bf16.mxu0 0
    %375 = vmatmul.mubr.bf16.gmra.mrb[0].mxu0 %v329
    %v376 = vpop.f32.mrb[0].mxu0
    %v377 = vadd.f32 0.0, %v376
    %v378 = vpop.f32.mrb[0].mxu0
    %v379 = vpop.f32.mrb[0].mxu0
    %v380 = vadd.f32 0.0, %v379
    %v381 = vpop.f32.mrb[0].mxu0
    %382 = vmatprep.mubr.bf16.mxu0 0
    %383 = vmatmul.mubr.bf16.gmra.mrb[0].mxu0 %v332
    %v384 = vpop.f32.mrb[0].mxu0
    %v385 = vadd.f32 0.0, %v384
    %v386 = vpop.f32.mrb[0].mxu0
    %v387 = vpop.f32.mrb[0].mxu0
    %v388 = vadd.f32 0.0, %v387
    %v389 = vpop.f32.mrb[0].mxu0
    %390 = vdwg.mxu0
    %v391 = vld [vmem:[#allocation3] sm:$0xff]
    %v392 = vld [vmem:[#allocation3 + $0x8] sm:$0xff]
    %v393 = vld [vmem:[#allocation3 + $0x10] sm:$0xff]
    %v394 = vld [vmem:[#allocation3 + $0x18] sm:$0xff]
    %v395 = vld [vmem:[#allocation3 + $0x20] sm:$0xff]
    %v396 = vld [vmem:[#allocation3 + $0x28] sm:$0xff]
    %v397 = vld [vmem:[#allocation3 + $0x30] sm:$0xff]
    %v398 = vld [vmem:[#allocation3 + $0x38] sm:$0xff]
    %v399 = vld [vmem:[#allocation3 + $0x40] sm:$0xff]
    %v400 = vld [vmem:[#allocation3 + $0x48] sm:$0xff]
    %v401 = vld [vmem:[#allocation3 + $0x50] sm:$0xff]
    %v402 = vld [vmem:[#allocation3 + $0x58] sm:$0xff]
    %v403 = vld [vmem:[#allocation3 + $0x60] sm:$0xff]
    %v404 = vld [vmem:[#allocation3 + $0x68] sm:$0xff]
    %v405 = vld [vmem:[#allocation3 + $0x70] sm:$0xff]
    %v406 = vld [vmem:[#allocation3 + $0x78] sm:$0xff]
    %407 = vmatprep.subr.mxu0 0.0
    %408 = vmatpush1.msra.mxu0 %v391
    %409 = vmatprep.subr.mxu0 0.0
    %410 = vmatpush1.msra.mxu0 %v392
    %411 = vmatprep.subr.mxu0 0.0
    %412 = vmatpush1.msra.mxu0 %v393
    %413 = vmatprep.subr.mxu0 0.0
    %414 = vmatpush1.msra.mxu0 %v394
    %415 = vmatprep.subr.mxu0 0.0
    %416 = vmatpush1.msra.mxu0 %v395
    %417 = vmatprep.subr.mxu0 0.0
    %418 = vmatpush1.msra.mxu0 %v396
    %419 = vmatprep.subr.mxu0 0.0
    %420 = vmatpush1.msra.mxu0 %v397
    %421 = vmatprep.subr.mxu0 0.0
    %422 = vmatpush1.msra.mxu0 %v398
    %423 = vmatprep.subr.mxu0 0.0
    %424 = vmatpush1.msra.mxu0 %v399
    %425 = vmatprep.subr.mxu0 0.0
    %426 = vmatpush1.msra.mxu0 %v400
    %427 = vmatprep.subr.mxu0 0.0
    %428 = vmatpush1.msra.mxu0 %v401
    %429 = vmatprep.subr.mxu0 0.0
    %430 = vmatpush1.msra.mxu0 %v402
    %431 = vmatprep.subr.mxu0 0.0
    %432 = vmatpush1.msra.mxu0 %v403
    %433 = vmatprep.subr.mxu0 0.0
    %434 = vmatpush1.msra.mxu0 %v404
    %435 = vmatprep.subr.mxu0 0.0
    %436 = vmatpush1.msra.mxu0 %v405
    %437 = vmatprep.subr.mxu0 0.0
    %438 = vmatpush1.msra.mxu0 %v406
    %439 = vmatprep.subr.mxu0 0.0
    %440 = vmatpush1.msra.mxu0 0.0
    %441 = vmatprep.subr.mxu0 0.0
    %442 = vmatpush1.msra.mxu0 0.0
    %443 = vmatprep.subr.mxu0 0.0
    %444 = vmatpush1.msra.mxu0 0.0
    %445 = vmatprep.subr.mxu0 0.0
    %446 = vmatpush1.msra.mxu0 0.0
    %447 = vmatprep.subr.mxu0 0.0
    %448 = vmatpush1.msra.mxu0 0.0
    %449 = vmatprep.subr.mxu0 0.0
    %450 = vmatpush1.msra.mxu0 0.0
    %451 = vmatprep.subr.mxu0 0.0
    %452 = vmatpush1.msra.mxu0 0.0
    %453 = vmatprep.subr.mxu0 0.0
    %454 = vmatpush1.msra.mxu0 0.0
    %455 = vmatprep.subr.mxu0 0.0
    %456 = vmatpush1.msra.mxu0 0.0
    %457 = vmatprep.subr.mxu0 0.0
    %458 = vmatpush1.msra.mxu0 0.0
    %459 = vmatprep.subr.mxu0 0.0
    %460 = vmatpush1.msra.mxu0 0.0
    %461 = vmatprep.subr.mxu0 0.0
    %462 = vmatpush1.msra.mxu0 0.0
    %463 = vmatprep.subr.mxu0 0.0
    %464 = vmatpush1.msra.mxu0 0.0
    %465 = vmatprep.subr.mxu0 0.0
    %466 = vmatpush1.msra.mxu0 0.0
    %467 = vmatprep.subr.mxu0 0.0
    %468 = vmatpush1.msra.mxu0 0.0
    %469 = vmatprep.subr.mxu0 0.0
    %470 = vmatpush1.msra.mxu0 0.0
    %471 = vmatprep.mubr.f32.mxu0 0.0
    %472 = vmatmul.mubr.f32.gmra.mrb[0].mxu0 %v369
    %v473 = vpop.f32.mrb[0].mxu0
    %v474 = vadd.f32 0.0, %v473
    %v475 = vpop.f32.mrb[0].mxu0
    %476 = vmatprep.mubr.f32.mxu0 0.0
    %477 = vmatmul.mubr.f32.gmra.mrb[0].mxu0 %v372
    %v478 = vpop.f32.mrb[0].mxu0
    %v479 = vadd.f32 0.0, %v478
    %v480 = vpop.f32.mrb[0].mxu0
    %481 = vdwg.mxu0
    %v482 = vadd.f32 %v300, %v474
    %v483 = vadd.f32 %v305, %v479
    %s484 = scalar_lea.vmem [#allocation3], 128
    %v485 = vld [vmem:[%s484] sm:$0xff]
    %v486 = vld [vmem:[%s484 + $0x8] sm:$0xff]
    %v487 = vld [vmem:[%s484 + $0x10] sm:$0xff]
    %v488 = vld [vmem:[%s484 + $0x18] sm:$0xff]
    %v489 = vld [vmem:[%s484 + $0x20] sm:$0xff]
    %v490 = vld [vmem:[%s484 + $0x28] sm:$0xff]
    %v491 = vld [vmem:[%s484 + $0x30] sm:$0xff]
    %v492 = vld [vmem:[%s484 + $0x38] sm:$0xff]
    %v493 = vld [vmem:[%s484 + $0x40] sm:$0xff]
    %v494 = vld [vmem:[%s484 + $0x48] sm:$0xff]
    %v495 = vld [vmem:[%s484 + $0x50] sm:$0xff]
    %v496 = vld [vmem:[%s484 + $0x58] sm:$0xff]
    %v497 = vld [vmem:[%s484 + $0x60] sm:$0xff]
    %v498 = vld [vmem:[%s484 + $0x68] sm:$0xff]
    %v499 = vld [vmem:[%s484 + $0x70] sm:$0xff]
    %v500 = vld [vmem:[%s484 + $0x78] sm:$0xff]
    %501 = vmatprep.subr.mxu0 0.0
    %502 = vmatpush1.msra.mxu0 %v485
    %503 = vmatprep.subr.mxu0 0.0
    %504 = vmatpush1.msra.mxu0 %v486
    %505 = vmatprep.subr.mxu0 0.0
    %506 = vmatpush1.msra.mxu0 %v487
    %507 = vmatprep.subr.mxu0 0.0
    %508 = vmatpush1.msra.mxu0 %v488
    %509 = vmatprep.subr.mxu0 0.0
    %510 = vmatpush1.msra.mxu0 %v489
    %511 = vmatprep.subr.mxu0 0.0
    %512 = vmatpush1.msra.mxu0 %v490
    %513 = vmatprep.subr.mxu0 0.0
    %514 = vmatpush1.msra.mxu0 %v491
    %515 = vmatprep.subr.mxu0 0.0
    %516 = vmatpush1.msra.mxu0 %v492
    %517 = vmatprep.subr.mxu0 0.0
    %518 = vmatpush1.msra.mxu0 %v493
    %519 = vmatprep.subr.mxu0 0.0
    %520 = vmatpush1.msra.mxu0 %v494
    %521 = vmatprep.subr.mxu0 0.0
    %522 = vmatpush1.msra.mxu0 %v495
    %523 = vmatprep.subr.mxu0 0.0
    %524 = vmatpush1.msra.mxu0 %v496
    %525 = vmatprep.subr.mxu0 0.0
    %526 = vmatpush1.msra.mxu0 %v497
    %527 = vmatprep.subr.mxu0 0.0
    %528 = vmatpush1.msra.mxu0 %v498
    %529 = vmatprep.subr.mxu0 0.0
    %530 = vmatpush1.msra.mxu0 %v499
    %531 = vmatprep.subr.mxu0 0.0
    %532 = vmatpush1.msra.mxu0 %v500
    %533 = vmatprep.subr.mxu0 0.0
    %534 = vmatpush1.msra.mxu0 0.0
    %535 = vmatprep.subr.mxu0 0.0
    %536 = vmatpush1.msra.mxu0 0.0
    %537 = vmatprep.subr.mxu0 0.0
    %538 = vmatpush1.msra.mxu0 0.0
    %539 = vmatprep.subr.mxu0 0.0
    %540 = vmatpush1.msra.mxu0 0.0
    %541 = vmatprep.subr.mxu0 0.0
    %542 = vmatpush1.msra.mxu0 0.0
    %543 = vmatprep.subr.mxu0 0.0
    %544 = vmatpush1.msra.mxu0 0.0
    %545 = vmatprep.subr.mxu0 0.0
    %546 = vmatpush1.msra.mxu0 0.0
    %547 = vmatprep.subr.mxu0 0.0
    %548 = vmatpush1.msra.mxu0 0.0
    %549 = vmatprep.subr.mxu0 0.0
    %550 = vmatpush1.msra.mxu0 0.0
    %551 = vmatprep.subr.mxu0 0.0
    %552 = vmatpush1.msra.mxu0 0.0
    %553 = vmatprep.subr.mxu0 0.0
    %554 = vmatpush1.msra.mxu0 0.0
    %555 = vmatprep.subr.mxu0 0.0
    %556 = vmatpush1.msra.mxu0 0.0
    %557 = vmatprep.subr.mxu0 0.0
    %558 = vmatpush1.msra.mxu0 0.0
    %559 = vmatprep.subr.mxu0 0.0
    %560 = vmatpush1.msra.mxu0 0.0
    %561 = vmatprep.subr.mxu0 0.0
    %562 = vmatpush1.msra.mxu0 0.0
    %563 = vmatprep.subr.mxu0 0.0
    %564 = vmatpush1.msra.mxu0 0.0
    %565 = vmatprep.mubr.f32.mxu0 0.0
    %566 = vmatmul.mubr.f32.gmra.mrb[0].mxu0 %v377
    %v567 = vpop.f32.mrb[0].mxu0
    %v568 = vadd.f32 0.0, %v567
    %v569 = vpop.f32.mrb[0].mxu0
    %570 = vmatprep.mubr.f32.mxu0 0.0
    %571 = vmatmul.mubr.f32.gmra.mrb[0].mxu0 %v380
    %v572 = vpop.f32.mrb[0].mxu0
    %v573 = vadd.f32 0.0, %v572
    %v574 = vpop.f32.mrb[0].mxu0
    %575 = vdwg.mxu0
    %v576 = vadd.f32 %v482, %v568
    %v577 = vadd.f32 %v483, %v573
    %s578 = scalar_lea.vmem [#allocation3], 256
    %v579 = vld [vmem:[%s578] sm:$0xff]
    %v580 = vld [vmem:[%s578 + $0x8] sm:$0xff]
    %v581 = vld [vmem:[%s578 + $0x10] sm:$0xff]
    %v582 = vld [vmem:[%s578 + $0x18] sm:$0xff]
    %v583 = vld [vmem:[%s578 + $0x20] sm:$0xff]
    %v584 = vld [vmem:[%s578 + $0x28] sm:$0xff]
    %v585 = vld [vmem:[%s578 + $0x30] sm:$0xff]
    %v586 = vld [vmem:[%s578 + $0x38] sm:$0xff]
    %v587 = vld [vmem:[%s578 + $0x40] sm:$0xff]
    %v588 = vld [vmem:[%s578 + $0x48] sm:$0xff]
    %v589 = vld [vmem:[%s578 + $0x50] sm:$0xff]
    %v590 = vld [vmem:[%s578 + $0x58] sm:$0xff]
    %v591 = vld [vmem:[%s578 + $0x60] sm:$0xff]
    %v592 = vld [vmem:[%s578 + $0x68] sm:$0xff]
    %v593 = vld [vmem:[%s578 + $0x70] sm:$0xff]
    %v594 = vld [vmem:[%s578 + $0x78] sm:$0xff]
    %595 = vmatprep.subr.mxu0 0.0
    %596 = vmatpush1.msra.mxu0 %v579
    %597 = vmatprep.subr.mxu0 0.0
    %598 = vmatpush1.msra.mxu0 %v580
    %599 = vmatprep.subr.mxu0 0.0
    %600 = vmatpush1.msra.mxu0 %v581
    %601 = vmatprep.subr.mxu0 0.0
    %602 = vmatpush1.msra.mxu0 %v582
    %603 = vmatprep.subr.mxu0 0.0
    %604 = vmatpush1.msra.mxu0 %v583
    %605 = vmatprep.subr.mxu0 0.0
    %606 = vmatpush1.msra.mxu0 %v584
    %607 = vmatprep.subr.mxu0 0.0
    %608 = vmatpush1.msra.mxu0 %v585
    %609 = vmatprep.subr.mxu0 0.0
    %610 = vmatpush1.msra.mxu0 %v586
    %611 = vmatprep.subr.mxu0 0.0
    %612 = vmatpush1.msra.mxu0 %v587
    %613 = vmatprep.subr.mxu0 0.0
    %614 = vmatpush1.msra.mxu0 %v588
    %615 = vmatprep.subr.mxu0 0.0
    %616 = vmatpush1.msra.mxu0 %v589
    %617 = vmatprep.subr.mxu0 0.0
    %618 = vmatpush1.msra.mxu0 %v590
    %619 = vmatprep.subr.mxu0 0.0
    %620 = vmatpush1.msra.mxu0 %v591
    %621 = vmatprep.subr.mxu0 0.0
    %622 = vmatpush1.msra.mxu0 %v592
    %623 = vmatprep.subr.mxu0 0.0
    %624 = vmatpush1.msra.mxu0 %v593
    %625 = vmatprep.subr.mxu0 0.0
    %626 = vmatpush1.msra.mxu0 %v594
    %627 = vmatprep.subr.mxu0 0.0
    %628 = vmatpush1.msra.mxu0 0.0
    %629 = vmatprep.subr.mxu0 0.0
    %630 = vmatpush1.msra.mxu0 0.0
    %631 = vmatprep.subr.mxu0 0.0
    %632 = vmatpush1.msra.mxu0 0.0
    %633 = vmatprep.subr.mxu0 0.0
    %634 = vmatpush1.msra.mxu0 0.0
    %635 = vmatprep.subr.mxu0 0.0
    %636 = vmatpush1.msra.mxu0 0.0
    %637 = vmatprep.subr.mxu0 0.0
    %638 = vmatpush1.msra.mxu0 0.0
    %639 = vmatprep.subr.mxu0 0.0
    %640 = vmatpush1.msra.mxu0 0.0
    %641 = vmatprep.subr.mxu0 0.0
    %642 = vmatpush1.msra.mxu0 0.0
    %643 = vmatprep.subr.mxu0 0.0
    %644 = vmatpush1.msra.mxu0 0.0
    %645 = vmatprep.subr.mxu0 0.0
    %646 = vmatpush1.msra.mxu0 0.0
    %647 = vmatprep.subr.mxu0 0.0
    %648 = vmatpush1.msra.mxu0 0.0
    %649 = vmatprep.subr.mxu0 0.0
    %650 = vmatpush1.msra.mxu0 0.0
    %651 = vmatprep.subr.mxu0 0.0
    %652 = vmatpush1.msra.mxu0 0.0
    %653 = vmatprep.subr.mxu0 0.0
    %654 = vmatpush1.msra.mxu0 0.0
    %655 = vmatprep.subr.mxu0 0.0
    %656 = vmatpush1.msra.mxu0 0.0
    %657 = vmatprep.subr.mxu0 0.0
    %658 = vmatpush1.msra.mxu0 0.0
    %659 = vmatprep.mubr.f32.mxu0 0.0
    %660 = vmatmul.mubr.f32.gmra.mrb[0].mxu0 %v385
    %v661 = vpop.f32.mrb[0].mxu0
    %v662 = vadd.f32 0.0, %v661
    %v663 = vpop.f32.mrb[0].mxu0
    %664 = vmatprep.mubr.f32.mxu0 0.0
    %665 = vmatmul.mubr.f32.gmra.mrb[0].mxu0 %v388
    %v666 = vpop.f32.mrb[0].mxu0
    %v667 = vadd.f32 0.0, %v666
    %v668 = vpop.f32.mrb[0].mxu0
    %669 = vdwg.mxu0
    %v670 = vadd.f32 %v576, %v662
    %v671 = vadd.f32 %v577, %v667
    %v672 = vmax.f32 %v670, 0.0
    %v673 = vmax.f32 %v671, 0.0
    %v674 = vld [vmem:[#allocation6] sm:$0xff]
    %v675 = vld [vmem:[#allocation6 + $0x8] sm:$0xff]
    %v676 = vld [vmem:[#allocation6 + $0x10] sm:$0xff]
    %v677 = vld [vmem:[#allocation6 + $0x18] sm:$0xff]
    %v678 = vld [vmem:[#allocation6 + $0x20] sm:$0xff]
    %v679 = vld [vmem:[#allocation6 + $0x28] sm:$0xff]
    %v680 = vld [vmem:[#allocation6 + $0x30] sm:$0xff]
    %v681 = vld [vmem:[#allocation6 + $0x38] sm:$0xff]
    %v682 = vld [vmem:[#allocation6 + $0x40] sm:$0xff]
    %v683 = vld [vmem:[#allocation6 + $0x48] sm:$0xff]
    %v684 = vld [vmem:[#allocation6 + $0x50] sm:$0xff]
    %v685 = vld [vmem:[#allocation6 + $0x58] sm:$0xff]
    %v686 = vld [vmem:[#allocation6 + $0x60] sm:$0xff]
    %v687 = vld [vmem:[#allocation6 + $0x68] sm:$0xff]
    %v688 = vld [vmem:[#allocation6 + $0x70] sm:$0xff]
    %v689 = vld [vmem:[#allocation6 + $0x78] sm:$0xff]
    %v690 = vld [vmem:[%s8] sm:$0x1]
    %v692 = vlaneseq
    %v693 = vshrl.u32 %v692, 7
    %v694 = vsub.s32 0, %v693
    %v695 = vrot.slane %v690, %v694
    %697 = vmatprep.subr.mxu0 0.0
    %698 = vmatpush1.msra.mxu0 %v674
    %699 = vmatprep.subr.mxu0 0.0
    %700 = vmatpush1.msra.mxu0 %v675
    %701 = vmatprep.subr.mxu0 0.0
    %702 = vmatpush1.msra.mxu0 %v676
    %703 = vmatprep.subr.mxu0 0.0
    %704 = vmatpush1.msra.mxu0 %v677
    %705 = vmatprep.subr.mxu0 0.0
    %706 = vmatpush1.msra.mxu0 %v678
    %707 = vmatprep.subr.mxu0 0.0
    %708 = vmatpush1.msra.mxu0 %v679
    %709 = vmatprep.subr.mxu0 0.0
    %710 = vmatpush1.msra.mxu0 %v680
    %711 = vmatprep.subr.mxu0 0.0
    %712 = vmatpush1.msra.mxu0 %v681
    %713 = vmatprep.subr.mxu0 0.0
    %714 = vmatpush1.msra.mxu0 %v682
    %715 = vmatprep.subr.mxu0 0.0
    %716 = vmatpush1.msra.mxu0 %v683
    %717 = vmatprep.subr.mxu0 0.0
    %718 = vmatpush1.msra.mxu0 %v684
    %719 = vmatprep.subr.mxu0 0.0
    %720 = vmatpush1.msra.mxu0 %v685
    %721 = vmatprep.subr.mxu0 0.0
    %722 = vmatpush1.msra.mxu0 %v686
    %723 = vmatprep.subr.mxu0 0.0
    %724 = vmatpush1.msra.mxu0 %v687
    %725 = vmatprep.subr.mxu0 0.0
    %726 = vmatpush1.msra.mxu0 %v688
    %727 = vmatprep.subr.mxu0 0.0
    %728 = vmatpush1.msra.mxu0 %v689
    %729 = vmatprep.subr.mxu0 0.0
    %730 = vmatpush1.msra.mxu0 0.0
    %731 = vmatprep.subr.mxu0 0.0
    %732 = vmatpush1.msra.mxu0 0.0
    %733 = vmatprep.subr.mxu0 0.0
    %734 = vmatpush1.msra.mxu0 0.0
    %735 = vmatprep.subr.mxu0 0.0
    %736 = vmatpush1.msra.mxu0 0.0
    %737 = vmatprep.subr.mxu0 0.0
    %738 = vmatpush1.msra.mxu0 0.0
    %739 = vmatprep.subr.mxu0 0.0
    %740 = vmatpush1.msra.mxu0 0.0
    %741 = vmatprep.subr.mxu0 0.0
    %742 = vmatpush1.msra.mxu0 0.0
    %743 = vmatprep.subr.mxu0 0.0
    %744 = vmatpush1.msra.mxu0 0.0
    %745 = vmatprep.subr.mxu0 0.0
    %746 = vmatpush1.msra.mxu0 0.0
    %747 = vmatprep.subr.mxu0 0.0
    %748 = vmatpush1.msra.mxu0 0.0
    %749 = vmatprep.subr.mxu0 0.0
    %750 = vmatpush1.msra.mxu0 0.0
    %751 = vmatprep.subr.mxu0 0.0
    %752 = vmatpush1.msra.mxu0 0.0
    %753 = vmatprep.subr.mxu0 0.0
    %754 = vmatpush1.msra.mxu0 0.0
    %755 = vmatprep.subr.mxu0 0.0
    %756 = vmatpush1.msra.mxu0 0.0
    %757 = vmatprep.subr.mxu0 0.0
    %758 = vmatpush1.msra.mxu0 0.0
    %759 = vmatprep.subr.mxu0 0.0
    %760 = vmatpush1.msra.mxu0 0.0
    %761 = vmatprep.mubr.f32.mxu0 0.0
    %762 = vmatmul.mubr.f32.gmra.mrb[0].mxu0 %v672
    %v763 = vpop.f32.mrb[0].mxu0
    %v764 = vadd.f32 %v695, %v763
    %v765 = vpop.f32.mrb[0].mxu0
    %766 = vmatprep.mubr.f32.mxu0 0.0
    %767 = vmatmul.mubr.f32.gmra.mrb[0].mxu0 %v673
    %v768 = vpop.f32.mrb[0].mxu0
    %v769 = vadd.f32 %v695, %v768
    %v770 = vpop.f32.mrb[0].mxu0
    %771 = vdwg.mxu0
    %v772 = vpack.c.bf16 %v673, %v672
    %773 = vmatprep.subr.bf16.mxu0 0
    %774 = vmatpush1.bf16.msra.mxu0 %v772
    %775 = vmatprep.subr.bf16.mxu0 0
    %776 = vmatpush1.bf16.msra.mxu0 0
    %777 = vmatprep.subr.bf16.mxu0 0
    %778 = vmatpush1.bf16.msra.mxu0 0
    %779 = vmatprep.subr.bf16.mxu0 0
    %780 = vmatpush1.bf16.msra.mxu0 0
    %781 = vmatprep.subr.bf16.mxu0 0
    %782 = vmatpush1.bf16.msra.mxu0 0
    %783 = vmatprep.subr.bf16.mxu0 0
    %784 = vmatpush1.bf16.msra.mxu0 0
    %785 = vmatprep.subr.bf16.mxu0 0
    %786 = vmatpush1.bf16.msra.mxu0 0
    %787 = vmatprep.subr.bf16.mxu0 0
    %788 = vmatpush1.bf16.msra.mxu0 0
    %789 = vmatprep.subr.bf16.mxu0 0
    %790 = vmatpush1.bf16.msra.mxu0 0
    %791 = vmatprep.subr.bf16.mxu0 0
    %792 = vmatpush1.bf16.msra.mxu0 0
    %793 = vmatprep.subr.bf16.mxu0 0
    %794 = vmatpush1.bf16.msra.mxu0 0
    %795 = vmatprep.subr.bf16.mxu0 0
    %796 = vmatpush1.bf16.msra.mxu0 0
    %797 = vmatprep.subr.bf16.mxu0 0
    %798 = vmatpush1.bf16.msra.mxu0 0
    %799 = vmatprep.subr.bf16.mxu0 0
    %800 = vmatpush1.bf16.msra.mxu0 0
    %801 = vmatprep.subr.bf16.mxu0 0
    %802 = vmatpush1.bf16.msra.mxu0 0
    %803 = vmatprep.subr.bf16.mxu0 0
    %804 = vmatpush1.bf16.msra.mxu0 0
    %805 = vmatprep.mubr.bf16.mxu0 0
    %806 = vmatmul.mubr.bf16.gmra.mrb[0].mxu0 %v326
    %v807 = vpop.f32.mrb[0].mxu0
    %v808 = vadd.f32 0.0, %v807
    %v809 = vpop.f32.mrb[0].mxu0
    %v810 = vpop.f32.mrb[0].mxu0
    %v811 = vadd.f32 0.0, %v810
    %v812 = vpop.f32.mrb[0].mxu0
    %813 = vmatprep.mubr.bf16.mxu0 0
    %814 = vmatmul.mubr.bf16.gmra.mrb[0].mxu0 %v329
    %v815 = vpop.f32.mrb[0].mxu0
    %v816 = vadd.f32 0.0, %v815
    %v817 = vpop.f32.mrb[0].mxu0
    %v818 = vpop.f32.mrb[0].mxu0
    %v819 = vadd.f32 0.0, %v818
    %v820 = vpop.f32.mrb[0].mxu0
    %821 = vmatprep.mubr.bf16.mxu0 0
    %822 = vmatmul.mubr.bf16.gmra.mrb[0].mxu0 %v332
    %v823 = vpop.f32.mrb[0].mxu0
    %v824 = vadd.f32 0.0, %v823
    %v825 = vpop.f32.mrb[0].mxu0
    %v826 = vpop.f32.mrb[0].mxu0
    %v827 = vadd.f32 0.0, %v826
    %v828 = vpop.f32.mrb[0].mxu0
    %829 = vdwg.mxu0
    %v830 = vld [vmem:[#allocation8] sm:$0xff]
    %v831 = vld [vmem:[#allocation8 + $0x8] sm:$0xff]
    %v832 = vld [vmem:[#allocation8 + $0x10] sm:$0xff]
    %v833 = vld [vmem:[#allocation8 + $0x18] sm:$0xff]
    %v834 = vld [vmem:[#allocation8 + $0x20] sm:$0xff]
    %v835 = vld [vmem:[#allocation8 + $0x28] sm:$0xff]
    %v836 = vld [vmem:[#allocation8 + $0x30] sm:$0xff]
    %v837 = vld [vmem:[#allocation8 + $0x38] sm:$0xff]
    %v838 = vld [vmem:[#allocation8 + $0x40] sm:$0xff]
    %v839 = vld [vmem:[#allocation8 + $0x48] sm:$0xff]
    %v840 = vld [vmem:[#allocation8 + $0x50] sm:$0xff]
    %v841 = vld [vmem:[#allocation8 + $0x58] sm:$0xff]
    %v842 = vld [vmem:[#allocation8 + $0x60] sm:$0xff]
    %v843 = vld [vmem:[#allocation8 + $0x68] sm:$0xff]
    %v844 = vld [vmem:[#allocation8 + $0x70] sm:$0xff]
    %v845 = vld [vmem:[#allocation8 + $0x78] sm:$0xff]
    %846 = vmatprep.subr.mxu0 0.0
    %847 = vmatpush1.msra.mxu0 %v830
    %848 = vmatprep.subr.mxu0 0.0
    %849 = vmatpush1.msra.mxu0 %v831
    %850 = vmatprep.subr.mxu0 0.0
    %851 = vmatpush1.msra.mxu0 %v832
    %852 = vmatprep.subr.mxu0 0.0
    %853 = vmatpush1.msra.mxu0 %v833
    %854 = vmatprep.subr.mxu0 0.0
    %855 = vmatpush1.msra.mxu0 %v834
    %856 = vmatprep.subr.mxu0 0.0
    %857 = vmatpush1.msra.mxu0 %v835
    %858 = vmatprep.subr.mxu0 0.0
    %859 = vmatpush1.msra.mxu0 %v836
    %860 = vmatprep.subr.mxu0 0.0
    %861 = vmatpush1.msra.mxu0 %v837
    %862 = vmatprep.subr.mxu0 0.0
    %863 = vmatpush1.msra.mxu0 %v838
    %864 = vmatprep.subr.mxu0 0.0
    %865 = vmatpush1.msra.mxu0 %v839
    %866 = vmatprep.subr.mxu0 0.0
    %867 = vmatpush1.msra.mxu0 %v840
    %868 = vmatprep.subr.mxu0 0.0
    %869 = vmatpush1.msra.mxu0 %v841
    %870 = vmatprep.subr.mxu0 0.0
    %871 = vmatpush1.msra.mxu0 %v842
    %872 = vmatprep.subr.mxu0 0.0
    %873 = vmatpush1.msra.mxu0 %v843
    %874 = vmatprep.subr.mxu0 0.0
    %875 = vmatpush1.msra.mxu0 %v844
    %876 = vmatprep.subr.mxu0 0.0
    %877 = vmatpush1.msra.mxu0 %v845
    %878 = vmatprep.subr.mxu0 0.0
    %879 = vmatpush1.msra.mxu0 0.0
    %880 = vmatprep.subr.mxu0 0.0
    %881 = vmatpush1.msra.mxu0 0.0
    %882 = vmatprep.subr.mxu0 0.0
    %883 = vmatpush1.msra.mxu0 0.0
    %884 = vmatprep.subr.mxu0 0.0
    %885 = vmatpush1.msra.mxu0 0.0
    %886 = vmatprep.subr.mxu0 0.0
    %887 = vmatpush1.msra.mxu0 0.0
    %888 = vmatprep.subr.mxu0 0.0
    %889 = vmatpush1.msra.mxu0 0.0
    %890 = vmatprep.subr.mxu0 0.0
    %891 = vmatpush1.msra.mxu0 0.0
    %892 = vmatprep.subr.mxu0 0.0
    %893 = vmatpush1.msra.mxu0 0.0
    %894 = vmatprep.subr.mxu0 0.0
    %895 = vmatpush1.msra.mxu0 0.0
    %896 = vmatprep.subr.mxu0 0.0
    %897 = vmatpush1.msra.mxu0 0.0
    %898 = vmatprep.subr.mxu0 0.0
    %899 = vmatpush1.msra.mxu0 0.0
    %900 = vmatprep.subr.mxu0 0.0
    %901 = vmatpush1.msra.mxu0 0.0
    %902 = vmatprep.subr.mxu0 0.0
    %903 = vmatpush1.msra.mxu0 0.0
    %904 = vmatprep.subr.mxu0 0.0
    %905 = vmatpush1.msra.mxu0 0.0
    %906 = vmatprep.subr.mxu0 0.0
    %907 = vmatpush1.msra.mxu0 0.0
    %908 = vmatprep.subr.mxu0 0.0
    %909 = vmatpush1.msra.mxu0 0.0
    %910 = vmatprep.mubr.f32.mxu0 0.0
    %911 = vmatmul.mubr.f32.gmra.mrb[0].mxu0 %v808
    %v912 = vpop.f32.mrb[0].mxu0
    %v913 = vadd.f32 0.0, %v912
    %v914 = vpop.f32.mrb[0].mxu0
    %915 = vmatprep.mubr.f32.mxu0 0.0
    %916 = vmatmul.mubr.f32.gmra.mrb[0].mxu0 %v811
    %v917 = vpop.f32.mrb[0].mxu0
    %v918 = vadd.f32 0.0, %v917
    %v919 = vpop.f32.mrb[0].mxu0
    %920 = vdwg.mxu0
    %v921 = vadd.f32 %v764, %v913
    %v922 = vadd.f32 %v769, %v918
    %s923 = scalar_lea.vmem [#allocation8], 128
    %v924 = vld [vmem:[%s923] sm:$0xff]
    %v925 = vld [vmem:[%s923 + $0x8] sm:$0xff]
    %v926 = vld [vmem:[%s923 + $0x10] sm:$0xff]
    %v927 = vld [vmem:[%s923 + $0x18] sm:$0xff]
    %v928 = vld [vmem:[%s923 + $0x20] sm:$0xff]
    %v929 = vld [vmem:[%s923 + $0x28] sm:$0xff]
    %v930 = vld [vmem:[%s923 + $0x30] sm:$0xff]
    %v931 = vld [vmem:[%s923 + $0x38] sm:$0xff]
    %v932 = vld [vmem:[%s923 + $0x40] sm:$0xff]
    %v933 = vld [vmem:[%s923 + $0x48] sm:$0xff]
    %v934 = vld [vmem:[%s923 + $0x50] sm:$0xff]
    %v935 = vld [vmem:[%s923 + $0x58] sm:$0xff]
    %v936 = vld [vmem:[%s923 + $0x60] sm:$0xff]
    %v937 = vld [vmem:[%s923 + $0x68] sm:$0xff]
    %v938 = vld [vmem:[%s923 + $0x70] sm:$0xff]
    %v939 = vld [vmem:[%s923 + $0x78] sm:$0xff]
    %940 = vmatprep.subr.mxu0 0.0
    %941 = vmatpush1.msra.mxu0 %v924
    %942 = vmatprep.subr.mxu0 0.0
    %943 = vmatpush1.msra.mxu0 %v925
    %944 = vmatprep.subr.mxu0 0.0
    %945 = vmatpush1.msra.mxu0 %v926
    %946 = vmatprep.subr.mxu0 0.0
    %947 = vmatpush1.msra.mxu0 %v927
    %948 = vmatprep.subr.mxu0 0.0
    %949 = vmatpush1.msra.mxu0 %v928
    %950 = vmatprep.subr.mxu0 0.0
    %951 = vmatpush1.msra.mxu0 %v929
    %952 = vmatprep.subr.mxu0 0.0
    %953 = vmatpush1.msra.mxu0 %v930
    %954 = vmatprep.subr.mxu0 0.0
    %955 = vmatpush1.msra.mxu0 %v931
    %956 = vmatprep.subr.mxu0 0.0
    %957 = vmatpush1.msra.mxu0 %v932
    %958 = vmatprep.subr.mxu0 0.0
    %959 = vmatpush1.msra.mxu0 %v933
    %960 = vmatprep.subr.mxu0 0.0
    %961 = vmatpush1.msra.mxu0 %v934
    %962 = vmatprep.subr.mxu0 0.0
    %963 = vmatpush1.msra.mxu0 %v935
    %964 = vmatprep.subr.mxu0 0.0
    %965 = vmatpush1.msra.mxu0 %v936
    %966 = vmatprep.subr.mxu0 0.0
    %967 = vmatpush1.msra.mxu0 %v937
    %968 = vmatprep.subr.mxu0 0.0
    %969 = vmatpush1.msra.mxu0 %v938
    %970 = vmatprep.subr.mxu0 0.0
    %971 = vmatpush1.msra.mxu0 %v939
    %972 = vmatprep.subr.mxu0 0.0
    %973 = vmatpush1.msra.mxu0 0.0
    %974 = vmatprep.subr.mxu0 0.0
    %975 = vmatpush1.msra.mxu0 0.0
    %976 = vmatprep.subr.mxu0 0.0
    %977 = vmatpush1.msra.mxu0 0.0
    %978 = vmatprep.subr.mxu0 0.0
    %979 = vmatpush1.msra.mxu0 0.0
    %980 = vmatprep.subr.mxu0 0.0
    %981 = vmatpush1.msra.mxu0 0.0
    %982 = vmatprep.subr.mxu0 0.0
    %983 = vmatpush1.msra.mxu0 0.0
    %984 = vmatprep.subr.mxu0 0.0
    %985 = vmatpush1.msra.mxu0 0.0
    %986 = vmatprep.subr.mxu0 0.0
    %987 = vmatpush1.msra.mxu0 0.0
    %988 = vmatprep.subr.mxu0 0.0
    %989 = vmatpush1.msra.mxu0 0.0
    %990 = vmatprep.subr.mxu0 0.0
    %991 = vmatpush1.msra.mxu0 0.0
    %992 = vmatprep.subr.mxu0 0.0
    %993 = vmatpush1.msra.mxu0 0.0
    %994 = vmatprep.subr.mxu0 0.0
    %995 = vmatpush1.msra.mxu0 0.0
    %996 = vmatprep.subr.mxu0 0.0
    %997 = vmatpush1.msra.mxu0 0.0
    %998 = vmatprep.subr.mxu0 0.0
    %999 = vmatpush1.msra.mxu0 0.0
    %1000 = vmatprep.subr.mxu0 0.0
    %1001 = vmatpush1.msra.mxu0 0.0
    %1002 = vmatprep.subr.mxu0 0.0
    %1003 = vmatpush1.msra.mxu0 0.0
    %1004 = vmatprep.mubr.f32.mxu0 0.0
    %1005 = vmatmul.mubr.f32.gmra.mrb[0].mxu0 %v816
    %v1006 = vpop.f32.mrb[0].mxu0
    %v1007 = vadd.f32 0.0, %v1006
    %v1008 = vpop.f32.mrb[0].mxu0
    %1009 = vmatprep.mubr.f32.mxu0 0.0
    %1010 = vmatmul.mubr.f32.gmra.mrb[0].mxu0 %v819
    %v1011 = vpop.f32.mrb[0].mxu0
    %v1012 = vadd.f32 0.0, %v1011
    %v1013 = vpop.f32.mrb[0].mxu0
    %1014 = vdwg.mxu0
    %v1015 = vadd.f32 %v921, %v1007
    %v1016 = vadd.f32 %v922, %v1012
    %s1017 = scalar_lea.vmem [#allocation8], 256
    %v1018 = vld [vmem:[%s1017] sm:$0xff]
    %v1019 = vld [vmem:[%s1017 + $0x8] sm:$0xff]
    %v1020 = vld [vmem:[%s1017 + $0x10] sm:$0xff]
    %v1021 = vld [vmem:[%s1017 + $0x18] sm:$0xff]
    %v1022 = vld [vmem:[%s1017 + $0x20] sm:$0xff]
    %v1023 = vld [vmem:[%s1017 + $0x28] sm:$0xff]
    %v1024 = vld [vmem:[%s1017 + $0x30] sm:$0xff]
    %v1025 = vld [vmem:[%s1017 + $0x38] sm:$0xff]
    %v1026 = vld [vmem:[%s1017 + $0x40] sm:$0xff]
    %v1027 = vld [vmem:[%s1017 + $0x48] sm:$0xff]
    %v1028 = vld [vmem:[%s1017 + $0x50] sm:$0xff]
    %v1029 = vld [vmem:[%s1017 + $0x58] sm:$0xff]
    %v1030 = vld [vmem:[%s1017 + $0x60] sm:$0xff]
    %v1031 = vld [vmem:[%s1017 + $0x68] sm:$0xff]
    %v1032 = vld [vmem:[%s1017 + $0x70] sm:$0xff]
    %v1033 = vld [vmem:[%s1017 + $0x78] sm:$0xff]
    %1034 = vmatprep.subr.mxu0 0.0
    %1035 = vmatpush1.msra.mxu0 %v1018
    %1036 = vmatprep.subr.mxu0 0.0
    %1037 = vmatpush1.msra.mxu0 %v1019
    %1038 = vmatprep.subr.mxu0 0.0
    %1039 = vmatpush1.msra.mxu0 %v1020
    %1040 = vmatprep.subr.mxu0 0.0
    %1041 = vmatpush1.msra.mxu0 %v1021
    %1042 = vmatprep.subr.mxu0 0.0
    %1043 = vmatpush1.msra.mxu0 %v1022
    %1044 = vmatprep.subr.mxu0 0.0
    %1045 = vmatpush1.msra.mxu0 %v1023
    %1046 = vmatprep.subr.mxu0 0.0
    %1047 = vmatpush1.msra.mxu0 %v1024
    %1048 = vmatprep.subr.mxu0 0.0
    %1049 = vmatpush1.msra.mxu0 %v1025
    %1050 = vmatprep.subr.mxu0 0.0
    %1051 = vmatpush1.msra.mxu0 %v1026
    %1052 = vmatprep.subr.mxu0 0.0
    %1053 = vmatpush1.msra.mxu0 %v1027
    %1054 = vmatprep.subr.mxu0 0.0
    %1055 = vmatpush1.msra.mxu0 %v1028
    %1056 = vmatprep.subr.mxu0 0.0
    %1057 = vmatpush1.msra.mxu0 %v1029
    %1058 = vmatprep.subr.mxu0 0.0
    %1059 = vmatpush1.msra.mxu0 %v1030
    %1060 = vmatprep.subr.mxu0 0.0
    %1061 = vmatpush1.msra.mxu0 %v1031
    %1062 = vmatprep.subr.mxu0 0.0
    %1063 = vmatpush1.msra.mxu0 %v1032
    %1064 = vmatprep.subr.mxu0 0.0
    %1065 = vmatpush1.msra.mxu0 %v1033
    %1066 = vmatprep.subr.mxu0 0.0
    %1067 = vmatpush1.msra.mxu0 0.0
    %1068 = vmatprep.subr.mxu0 0.0
    %1069 = vmatpush1.msra.mxu0 0.0
    %1070 = vmatprep.subr.mxu0 0.0
    %1071 = vmatpush1.msra.mxu0 0.0
    %1072 = vmatprep.subr.mxu0 0.0
    %1073 = vmatpush1.msra.mxu0 0.0
    %1074 = vmatprep.subr.mxu0 0.0
    %1075 = vmatpush1.msra.mxu0 0.0
    %1076 = vmatprep.subr.mxu0 0.0
    %1077 = vmatpush1.msra.mxu0 0.0
    %1078 = vmatprep.subr.mxu0 0.0
    %1079 = vmatpush1.msra.mxu0 0.0
    %1080 = vmatprep.subr.mxu0 0.0
    %1081 = vmatpush1.msra.mxu0 0.0
    %1082 = vmatprep.subr.mxu0 0.0
    %1083 = vmatpush1.msra.mxu0 0.0
    %1084 = vmatprep.subr.mxu0 0.0
    %1085 = vmatpush1.msra.mxu0 0.0
    %1086 = vmatprep.subr.mxu0 0.0
    %1087 = vmatpush1.msra.mxu0 0.0
    %1088 = vmatprep.subr.mxu0 0.0
    %1089 = vmatpush1.msra.mxu0 0.0
    %1090 = vmatprep.subr.mxu0 0.0
    %1091 = vmatpush1.msra.mxu0 0.0
    %1092 = vmatprep.subr.mxu0 0.0
    %1093 = vmatpush1.msra.mxu0 0.0
    %1094 = vmatprep.subr.mxu0 0.0
    %1095 = vmatpush1.msra.mxu0 0.0
    %1096 = vmatprep.subr.mxu0 0.0
    %1097 = vmatpush1.msra.mxu0 0.0
    %1098 = vmatprep.mubr.f32.mxu0 0.0
    %1099 = vmatmul.mubr.f32.gmra.mrb[0].mxu0 %v824
    %v1100 = vpop.f32.mrb[0].mxu0
    %v1101 = vadd.f32 0.0, %v1100
    %v1102 = vpop.f32.mrb[0].mxu0
    %1103 = vmatprep.mubr.f32.mxu0 0.0
    %1104 = vmatmul.mubr.f32.gmra.mrb[0].mxu0 %v827
    %v1105 = vpop.f32.mrb[0].mxu0
    %v1106 = vadd.f32 0.0, %v1105
    %v1107 = vpop.f32.mrb[0].mxu0
    %1108 = vdwg.mxu0
    %v1109 = vadd.f32 %v1015, %v1101
    %v1110 = vadd.f32 %v1016, %v1106
    %v1111 = vmax.f32 %v1109, 0.0
    %v1112 = vmax.f32 %v1110, 0.0
    %v1113 = vld [vmem:[#allocation9] sm:$0xff]
    %v1114 = vld [vmem:[#allocation9 + $0x8] sm:$0xff]
    %v1115 = vld [vmem:[#allocation9 + $0x10] sm:$0xff]
    %v1116 = vld [vmem:[#allocation9 + $0x18] sm:$0xff]
    %v1117 = vld [vmem:[#allocation9 + $0x20] sm:$0xff]
    %v1118 = vld [vmem:[#allocation9 + $0x28] sm:$0xff]
    %v1119 = vld [vmem:[#allocation9 + $0x30] sm:$0xff]
    %v1120 = vld [vmem:[#allocation9 + $0x38] sm:$0xff]
    %v1121 = vld [vmem:[#allocation9 + $0x40] sm:$0xff]
    %v1122 = vld [vmem:[#allocation9 + $0x48] sm:$0xff]
    %v1123 = vld [vmem:[#allocation9 + $0x50] sm:$0xff]
    %v1124 = vld [vmem:[#allocation9 + $0x58] sm:$0xff]
    %v1125 = vld [vmem:[#allocation9 + $0x60] sm:$0xff]
    %v1126 = vld [vmem:[#allocation9 + $0x68] sm:$0xff]
    %v1127 = vld [vmem:[#allocation9 + $0x70] sm:$0xff]
    %v1128 = vld [vmem:[#allocation9 + $0x78] sm:$0xff]
    %v1129 = vld [vmem:[%s11] sm:$0x1]
    %v1131 = vlaneseq
    %v1132 = vshrl.u32 %v1131, 7
    %v1133 = vsub.s32 0, %v1132
    %v1134 = vrot.slane %v1129, %v1133
    %1136 = vmatprep.subr.mxu0 0.0
    %1137 = vmatpush1.msra.mxu0 %v1113
    %1138 = vmatprep.subr.mxu0 0.0
    %1139 = vmatpush1.msra.mxu0 %v1114
    %1140 = vmatprep.subr.mxu0 0.0
    %1141 = vmatpush1.msra.mxu0 %v1115
    %1142 = vmatprep.subr.mxu0 0.0
    %1143 = vmatpush1.msra.mxu0 %v1116
    %1144 = vmatprep.subr.mxu0 0.0
    %1145 = vmatpush1.msra.mxu0 %v1117
    %1146 = vmatprep.subr.mxu0 0.0
    %1147 = vmatpush1.msra.mxu0 %v1118
    %1148 = vmatprep.subr.mxu0 0.0
    %1149 = vmatpush1.msra.mxu0 %v1119
    %1150 = vmatprep.subr.mxu0 0.0
    %1151 = vmatpush1.msra.mxu0 %v1120
    %1152 = vmatprep.subr.mxu0 0.0
    %1153 = vmatpush1.msra.mxu0 %v1121
    %1154 = vmatprep.subr.mxu0 0.0
    %1155 = vmatpush1.msra.mxu0 %v1122
    %1156 = vmatprep.subr.mxu0 0.0
    %1157 = vmatpush1.msra.mxu0 %v1123
    %1158 = vmatprep.subr.mxu0 0.0
    %1159 = vmatpush1.msra.mxu0 %v1124
    %1160 = vmatprep.subr.mxu0 0.0
    %1161 = vmatpush1.msra.mxu0 %v1125
    %1162 = vmatprep.subr.mxu0 0.0
    %1163 = vmatpush1.msra.mxu0 %v1126
    %1164 = vmatprep.subr.mxu0 0.0
    %1165 = vmatpush1.msra.mxu0 %v1127
    %1166 = vmatprep.subr.mxu0 0.0
    %1167 = vmatpush1.msra.mxu0 %v1128
    %1168 = vmatprep.subr.mxu0 0.0
    %1169 = vmatpush1.msra.mxu0 0.0
    %1170 = vmatprep.subr.mxu0 0.0
    %1171 = vmatpush1.msra.mxu0 0.0
    %1172 = vmatprep.subr.mxu0 0.0
    %1173 = vmatpush1.msra.mxu0 0.0
    %1174 = vmatprep.subr.mxu0 0.0
    %1175 = vmatpush1.msra.mxu0 0.0
    %1176 = vmatprep.subr.mxu0 0.0
    %1177 = vmatpush1.msra.mxu0 0.0
    %1178 = vmatprep.subr.mxu0 0.0
    %1179 = vmatpush1.msra.mxu0 0.0
    %1180 = vmatprep.subr.mxu0 0.0
    %1181 = vmatpush1.msra.mxu0 0.0
    %1182 = vmatprep.subr.mxu0 0.0
    %1183 = vmatpush1.msra.mxu0 0.0
    %1184 = vmatprep.subr.mxu0 0.0
    %1185 = vmatpush1.msra.mxu0 0.0
    %1186 = vmatprep.subr.mxu0 0.0
    %1187 = vmatpush1.msra.mxu0 0.0
    %1188 = vmatprep.subr.mxu0 0.0
    %1189 = vmatpush1.msra.mxu0 0.0
    %1190 = vmatprep.subr.mxu0 0.0
    %1191 = vmatpush1.msra.mxu0 0.0
    %1192 = vmatprep.subr.mxu0 0.0
    %1193 = vmatpush1.msra.mxu0 0.0
    %1194 = vmatprep.subr.mxu0 0.0
    %1195 = vmatpush1.msra.mxu0 0.0
    %1196 = vmatprep.subr.mxu0 0.0
    %1197 = vmatpush1.msra.mxu0 0.0
    %1198 = vmatprep.subr.mxu0 0.0
    %1199 = vmatpush1.msra.mxu0 0.0
    %1200 = vmatprep.mubr.f32.mxu0 0.0
    %1201 = vmatmul.mubr.f32.gmra.mrb[0].mxu0 %v1111
    %v1202 = vpop.f32.mrb[0].mxu0
    %v1203 = vadd.f32 %v1134, %v1202
    %v1204 = vpop.f32.mrb[0].mxu0
    %1205 = vmatprep.mubr.f32.mxu0 0.0
    %1206 = vmatmul.mubr.f32.gmra.mrb[0].mxu0 %v1112
    %v1207 = vpop.f32.mrb[0].mxu0
    %v1208 = vadd.f32 %v1134, %v1207
    %v1209 = vpop.f32.mrb[0].mxu0
    %1210 = vdwg.mxu0
    %v1211 = vpack.c.bf16 %v1112, %v1111
    %1212 = vmatprep.subr.bf16.mxu0 0
    %1213 = vmatpush1.bf16.msra.mxu0 %v1211
    %1214 = vmatprep.subr.bf16.mxu0 0
    %1215 = vmatpush1.bf16.msra.mxu0 0
    %1216 = vmatprep.subr.bf16.mxu0 0
    %1217 = vmatpush1.bf16.msra.mxu0 0
    %1218 = vmatprep.subr.bf16.mxu0 0
    %1219 = vmatpush1.bf16.msra.mxu0 0
    %1220 = vmatprep.subr.bf16.mxu0 0
    %1221 = vmatpush1.bf16.msra.mxu0 0
    %1222 = vmatprep.subr.bf16.mxu0 0
    %1223 = vmatpush1.bf16.msra.mxu0 0
    %1224 = vmatprep.subr.bf16.mxu0 0
    %1225 = vmatpush1.bf16.msra.mxu0 0
    %1226 = vmatprep.subr.bf16.mxu0 0
    %1227 = vmatpush1.bf16.msra.mxu0 0
    %1228 = vmatprep.subr.bf16.mxu0 0
    %1229 = vmatpush1.bf16.msra.mxu0 0
    %1230 = vmatprep.subr.bf16.mxu0 0
    %1231 = vmatpush1.bf16.msra.mxu0 0
    %1232 = vmatprep.subr.bf16.mxu0 0
    %1233 = vmatpush1.bf16.msra.mxu0 0
    %1234 = vmatprep.subr.bf16.mxu0 0
    %1235 = vmatpush1.bf16.msra.mxu0 0
    %1236 = vmatprep.subr.bf16.mxu0 0
    %1237 = vmatpush1.bf16.msra.mxu0 0
    %1238 = vmatprep.subr.bf16.mxu0 0
    %1239 = vmatpush1.bf16.msra.mxu0 0
    %1240 = vmatprep.subr.bf16.mxu0 0
    %1241 = vmatpush1.bf16.msra.mxu0 0
    %1242 = vmatprep.subr.bf16.mxu0 0
    %1243 = vmatpush1.bf16.msra.mxu0 0
    %1244 = vmatprep.mubr.bf16.mxu0 0
    %1245 = vmatmul.mubr.bf16.gmra.mrb[0].mxu0 %v326
    %v1246 = vpop.f32.mrb[0].mxu0
    %v1247 = vadd.f32 0.0, %v1246
    %v1248 = vpop.f32.mrb[0].mxu0
    %v1249 = vpop.f32.mrb[0].mxu0
    %v1250 = vadd.f32 0.0, %v1249
    %v1251 = vpop.f32.mrb[0].mxu0
    %1252 = vmatprep.mubr.bf16.mxu0 0
    %1253 = vmatmul.mubr.bf16.gmra.mrb[0].mxu0 %v329
    %v1254 = vpop.f32.mrb[0].mxu0
    %v1255 = vadd.f32 0.0, %v1254
    %v1256 = vpop.f32.mrb[0].mxu0
    %v1257 = vpop.f32.mrb[0].mxu0
    %v1258 = vadd.f32 0.0, %v1257
    %v1259 = vpop.f32.mrb[0].mxu0
    %1260 = vmatprep.mubr.bf16.mxu0 0
    %1261 = vmatmul.mubr.bf16.gmra.mrb[0].mxu0 %v332
    %v1262 = vpop.f32.mrb[0].mxu0
    %v1263 = vadd.f32 0.0, %v1262
    %v1264 = vpop.f32.mrb[0].mxu0
    %v1265 = vpop.f32.mrb[0].mxu0
    %v1266 = vadd.f32 0.0, %v1265
    %v1267 = vpop.f32.mrb[0].mxu0
    %1268 = vdwg.mxu0
    %v1269 = vld [vmem:[#allocation11] sm:$0xff]
    %v1270 = vld [vmem:[#allocation11 + $0x8] sm:$0xff]
    %v1271 = vld [vmem:[#allocation11 + $0x10] sm:$0xff]
    %v1272 = vld [vmem:[#allocation11 + $0x18] sm:$0xff]
    %v1273 = vld [vmem:[#allocation11 + $0x20] sm:$0xff]
    %v1274 = vld [vmem:[#allocation11 + $0x28] sm:$0xff]
    %v1275 = vld [vmem:[#allocation11 + $0x30] sm:$0xff]
    %v1276 = vld [vmem:[#allocation11 + $0x38] sm:$0xff]
    %v1277 = vld [vmem:[#allocation11 + $0x40] sm:$0xff]
    %v1278 = vld [vmem:[#allocation11 + $0x48] sm:$0xff]
    %v1279 = vld [vmem:[#allocation11 + $0x50] sm:$0xff]
    %v1280 = vld [vmem:[#allocation11 + $0x58] sm:$0xff]
    %v1281 = vld [vmem:[#allocation11 + $0x60] sm:$0xff]
    %v1282 = vld [vmem:[#allocation11 + $0x68] sm:$0xff]
    %v1283 = vld [vmem:[#allocation11 + $0x70] sm:$0xff]
    %v1284 = vld [vmem:[#allocation11 + $0x78] sm:$0xff]
    %1285 = vmatprep.subr.mxu0 0.0
    %1286 = vmatpush1.msra.mxu0 %v1269
    %1287 = vmatprep.subr.mxu0 0.0
    %1288 = vmatpush1.msra.mxu0 %v1270
    %1289 = vmatprep.subr.mxu0 0.0
    %1290 = vmatpush1.msra.mxu0 %v1271
    %1291 = vmatprep.subr.mxu0 0.0
    %1292 = vmatpush1.msra.mxu0 %v1272
    %1293 = vmatprep.subr.mxu0 0.0
    %1294 = vmatpush1.msra.mxu0 %v1273
    %1295 = vmatprep.subr.mxu0 0.0
    %1296 = vmatpush1.msra.mxu0 %v1274
    %1297 = vmatprep.subr.mxu0 0.0
    %1298 = vmatpush1.msra.mxu0 %v1275
    %1299 = vmatprep.subr.mxu0 0.0
    %1300 = vmatpush1.msra.mxu0 %v1276
    %1301 = vmatprep.subr.mxu0 0.0
    %1302 = vmatpush1.msra.mxu0 %v1277
    %1303 = vmatprep.subr.mxu0 0.0
    %1304 = vmatpush1.msra.mxu0 %v1278
    %1305 = vmatprep.subr.mxu0 0.0
    %1306 = vmatpush1.msra.mxu0 %v1279
    %1307 = vmatprep.subr.mxu0 0.0
    %1308 = vmatpush1.msra.mxu0 %v1280
    %1309 = vmatprep.subr.mxu0 0.0
    %1310 = vmatpush1.msra.mxu0 %v1281
    %1311 = vmatprep.subr.mxu0 0.0
    %1312 = vmatpush1.msra.mxu0 %v1282
    %1313 = vmatprep.subr.mxu0 0.0
    %1314 = vmatpush1.msra.mxu0 %v1283
    %1315 = vmatprep.subr.mxu0 0.0
    %1316 = vmatpush1.msra.mxu0 %v1284
    %1317 = vmatprep.subr.mxu0 0.0
    %1318 = vmatpush1.msra.mxu0 0.0
    %1319 = vmatprep.subr.mxu0 0.0
    %1320 = vmatpush1.msra.mxu0 0.0
    %1321 = vmatprep.subr.mxu0 0.0
    %1322 = vmatpush1.msra.mxu0 0.0
    %1323 = vmatprep.subr.mxu0 0.0
    %1324 = vmatpush1.msra.mxu0 0.0
    %1325 = vmatprep.subr.mxu0 0.0
    %1326 = vmatpush1.msra.mxu0 0.0
    %1327 = vmatprep.subr.mxu0 0.0
    %1328 = vmatpush1.msra.mxu0 0.0
    %1329 = vmatprep.subr.mxu0 0.0
    %1330 = vmatpush1.msra.mxu0 0.0
    %1331 = vmatprep.subr.mxu0 0.0
    %1332 = vmatpush1.msra.mxu0 0.0
    %1333 = vmatprep.subr.mxu0 0.0
    %1334 = vmatpush1.msra.mxu0 0.0
    %1335 = vmatprep.subr.mxu0 0.0
    %1336 = vmatpush1.msra.mxu0 0.0
    %1337 = vmatprep.subr.mxu0 0.0
    %1338 = vmatpush1.msra.mxu0 0.0
    %1339 = vmatprep.subr.mxu0 0.0
    %1340 = vmatpush1.msra.mxu0 0.0
    %1341 = vmatprep.subr.mxu0 0.0
    %1342 = vmatpush1.msra.mxu0 0.0
    %1343 = vmatprep.subr.mxu0 0.0
    %1344 = vmatpush1.msra.mxu0 0.0
    %1345 = vmatprep.subr.mxu0 0.0
    %1346 = vmatpush1.msra.mxu0 0.0
    %1347 = vmatprep.subr.mxu0 0.0
    %1348 = vmatpush1.msra.mxu0 0.0
    %1349 = vmatprep.mubr.f32.mxu0 0.0
    %1350 = vmatmul.mubr.f32.gmra.mrb[0].mxu0 %v1247
    %v1351 = vpop.f32.mrb[0].mxu0
    %v1352 = vadd.f32 0.0, %v1351
    %v1353 = vpop.f32.mrb[0].mxu0
    %1354 = vmatprep.mubr.f32.mxu0 0.0
    %1355 = vmatmul.mubr.f32.gmra.mrb[0].mxu0 %v1250
    %v1356 = vpop.f32.mrb[0].mxu0
    %v1357 = vadd.f32 0.0, %v1356
    %v1358 = vpop.f32.mrb[0].mxu0
    %1359 = vdwg.mxu0
    %v1360 = vadd.f32 %v1203, %v1352
    %v1361 = vadd.f32 %v1208, %v1357
    %s1362 = scalar_lea.vmem [#allocation11], 128
    %v1363 = vld [vmem:[%s1362] sm:$0xff]
    %v1364 = vld [vmem:[%s1362 + $0x8] sm:$0xff]
    %v1365 = vld [vmem:[%s1362 + $0x10] sm:$0xff]
    %v1366 = vld [vmem:[%s1362 + $0x18] sm:$0xff]
    %v1367 = vld [vmem:[%s1362 + $0x20] sm:$0xff]
    %v1368 = vld [vmem:[%s1362 + $0x28] sm:$0xff]
    %v1369 = vld [vmem:[%s1362 + $0x30] sm:$0xff]
    %v1370 = vld [vmem:[%s1362 + $0x38] sm:$0xff]
    %v1371 = vld [vmem:[%s1362 + $0x40] sm:$0xff]
    %v1372 = vld [vmem:[%s1362 + $0x48] sm:$0xff]
    %v1373 = vld [vmem:[%s1362 + $0x50] sm:$0xff]
    %v1374 = vld [vmem:[%s1362 + $0x58] sm:$0xff]
    %v1375 = vld [vmem:[%s1362 + $0x60] sm:$0xff]
    %v1376 = vld [vmem:[%s1362 + $0x68] sm:$0xff]
    %v1377 = vld [vmem:[%s1362 + $0x70] sm:$0xff]
    %v1378 = vld [vmem:[%s1362 + $0x78] sm:$0xff]
    %1379 = vmatprep.subr.mxu0 0.0
    %1380 = vmatpush1.msra.mxu0 %v1363
    %1381 = vmatprep.subr.mxu0 0.0
    %1382 = vmatpush1.msra.mxu0 %v1364
    %1383 = vmatprep.subr.mxu0 0.0
    %1384 = vmatpush1.msra.mxu0 %v1365
    %1385 = vmatprep.subr.mxu0 0.0
    %1386 = vmatpush1.msra.mxu0 %v1366
    %1387 = vmatprep.subr.mxu0 0.0
    %1388 = vmatpush1.msra.mxu0 %v1367
    %1389 = vmatprep.subr.mxu0 0.0
    %1390 = vmatpush1.msra.mxu0 %v1368
    %1391 = vmatprep.subr.mxu0 0.0
    %1392 = vmatpush1.msra.mxu0 %v1369
    %1393 = vmatprep.subr.mxu0 0.0
    %1394 = vmatpush1.msra.mxu0 %v1370
    %1395 = vmatprep.subr.mxu0 0.0
    %1396 = vmatpush1.msra.mxu0 %v1371
    %1397 = vmatprep.subr.mxu0 0.0
    %1398 = vmatpush1.msra.mxu0 %v1372
    %1399 = vmatprep.subr.mxu0 0.0
    %1400 = vmatpush1.msra.mxu0 %v1373
    %1401 = vmatprep.subr.mxu0 0.0
    %1402 = vmatpush1.msra.mxu0 %v1374
    %1403 = vmatprep.subr.mxu0 0.0
    %1404 = vmatpush1.msra.mxu0 %v1375
    %1405 = vmatprep.subr.mxu0 0.0
    %1406 = vmatpush1.msra.mxu0 %v1376
    %1407 = vmatprep.subr.mxu0 0.0
    %1408 = vmatpush1.msra.mxu0 %v1377
    %1409 = vmatprep.subr.mxu0 0.0
    %1410 = vmatpush1.msra.mxu0 %v1378
    %1411 = vmatprep.subr.mxu0 0.0
    %1412 = vmatpush1.msra.mxu0 0.0
    %1413 = vmatprep.subr.mxu0 0.0
    %1414 = vmatpush1.msra.mxu0 0.0
    %1415 = vmatprep.subr.mxu0 0.0
    %1416 = vmatpush1.msra.mxu0 0.0
    %1417 = vmatprep.subr.mxu0 0.0
    %1418 = vmatpush1.msra.mxu0 0.0
    %1419 = vmatprep.subr.mxu0 0.0
    %1420 = vmatpush1.msra.mxu0 0.0
    %1421 = vmatprep.subr.mxu0 0.0
    %1422 = vmatpush1.msra.mxu0 0.0
    %1423 = vmatprep.subr.mxu0 0.0
    %1424 = vmatpush1.msra.mxu0 0.0
    %1425 = vmatprep.subr.mxu0 0.0
    %1426 = vmatpush1.msra.mxu0 0.0
    %1427 = vmatprep.subr.mxu0 0.0
    %1428 = vmatpush1.msra.mxu0 0.0
    %1429 = vmatprep.subr.mxu0 0.0
    %1430 = vmatpush1.msra.mxu0 0.0
    %1431 = vmatprep.subr.mxu0 0.0
    %1432 = vmatpush1.msra.mxu0 0.0
    %1433 = vmatprep.subr.mxu0 0.0
    %1434 = vmatpush1.msra.mxu0 0.0
    %1435 = vmatprep.subr.mxu0 0.0
    %1436 = vmatpush1.msra.mxu0 0.0
    %1437 = vmatprep.subr.mxu0 0.0
    %1438 = vmatpush1.msra.mxu0 0.0
    %1439 = vmatprep.subr.mxu0 0.0
    %1440 = vmatpush1.msra.mxu0 0.0
    %1441 = vmatprep.subr.mxu0 0.0
    %1442 = vmatpush1.msra.mxu0 0.0
    %1443 = vmatprep.mubr.f32.mxu0 0.0
    %1444 = vmatmul.mubr.f32.gmra.mrb[0].mxu0 %v1255
    %v1445 = vpop.f32.mrb[0].mxu0
    %v1446 = vadd.f32 0.0, %v1445
    %v1447 = vpop.f32.mrb[0].mxu0
    %1448 = vmatprep.mubr.f32.mxu0 0.0
    %1449 = vmatmul.mubr.f32.gmra.mrb[0].mxu0 %v1258
    %v1450 = vpop.f32.mrb[0].mxu0
    %v1451 = vadd.f32 0.0, %v1450
    %v1452 = vpop.f32.mrb[0].mxu0
    %1453 = vdwg.mxu0
    %v1454 = vadd.f32 %v1360, %v1446
    %v1455 = vadd.f32 %v1361, %v1451
    %s1456 = scalar_lea.vmem [#allocation11], 256
    %v1457 = vld [vmem:[%s1456] sm:$0xff]
    %v1458 = vld [vmem:[%s1456 + $0x8] sm:$0xff]
    %v1459 = vld [vmem:[%s1456 + $0x10] sm:$0xff]
    %v1460 = vld [vmem:[%s1456 + $0x18] sm:$0xff]
    %v1461 = vld [vmem:[%s1456 + $0x20] sm:$0xff]
    %v1462 = vld [vmem:[%s1456 + $0x28] sm:$0xff]
    %v1463 = vld [vmem:[%s1456 + $0x30] sm:$0xff]
    %v1464 = vld [vmem:[%s1456 + $0x38] sm:$0xff]
    %v1465 = vld [vmem:[%s1456 + $0x40] sm:$0xff]
    %v1466 = vld [vmem:[%s1456 + $0x48] sm:$0xff]
    %v1467 = vld [vmem:[%s1456 + $0x50] sm:$0xff]
    %v1468 = vld [vmem:[%s1456 + $0x58] sm:$0xff]
    %v1469 = vld [vmem:[%s1456 + $0x60] sm:$0xff]
    %v1470 = vld [vmem:[%s1456 + $0x68] sm:$0xff]
    %v1471 = vld [vmem:[%s1456 + $0x70] sm:$0xff]
    %v1472 = vld [vmem:[%s1456 + $0x78] sm:$0xff]
    %1473 = vmatprep.subr.mxu0 0.0
    %1474 = vmatpush1.msra.mxu0 %v1457
    %1475 = vmatprep.subr.mxu0 0.0
    %1476 = vmatpush1.msra.mxu0 %v1458
    %1477 = vmatprep.subr.mxu0 0.0
    %1478 = vmatpush1.msra.mxu0 %v1459
    %1479 = vmatprep.subr.mxu0 0.0
    %1480 = vmatpush1.msra.mxu0 %v1460
    %1481 = vmatprep.subr.mxu0 0.0
    %1482 = vmatpush1.msra.mxu0 %v1461
    %1483 = vmatprep.subr.mxu0 0.0
    %1484 = vmatpush1.msra.mxu0 %v1462
    %1485 = vmatprep.subr.mxu0 0.0
    %1486 = vmatpush1.msra.mxu0 %v1463
    %1487 = vmatprep.subr.mxu0 0.0
    %1488 = vmatpush1.msra.mxu0 %v1464
    %1489 = vmatprep.subr.mxu0 0.0
    %1490 = vmatpush1.msra.mxu0 %v1465
    %1491 = vmatprep.subr.mxu0 0.0
    %1492 = vmatpush1.msra.mxu0 %v1466
    %1493 = vmatprep.subr.mxu0 0.0
    %1494 = vmatpush1.msra.mxu0 %v1467
    %1495 = vmatprep.subr.mxu0 0.0
    %1496 = vmatpush1.msra.mxu0 %v1468
    %1497 = vmatprep.subr.mxu0 0.0
    %1498 = vmatpush1.msra.mxu0 %v1469
    %1499 = vmatprep.subr.mxu0 0.0
    %1500 = vmatpush1.msra.mxu0 %v1470
    %1501 = vmatprep.subr.mxu0 0.0
    %1502 = vmatpush1.msra.mxu0 %v1471
    %1503 = vmatprep.subr.mxu0 0.0
    %1504 = vmatpush1.msra.mxu0 %v1472
    %1505 = vmatprep.subr.mxu0 0.0
    %1506 = vmatpush1.msra.mxu0 0.0
    %1507 = vmatprep.subr.mxu0 0.0
    %1508 = vmatpush1.msra.mxu0 0.0
    %1509 = vmatprep.subr.mxu0 0.0
    %1510 = vmatpush1.msra.mxu0 0.0
    %1511 = vmatprep.subr.mxu0 0.0
    %1512 = vmatpush1.msra.mxu0 0.0
    %1513 = vmatprep.subr.mxu0 0.0
    %1514 = vmatpush1.msra.mxu0 0.0
    %1515 = vmatprep.subr.mxu0 0.0
    %1516 = vmatpush1.msra.mxu0 0.0
    %1517 = vmatprep.subr.mxu0 0.0
    %1518 = vmatpush1.msra.mxu0 0.0
    %1519 = vmatprep.subr.mxu0 0.0
    %1520 = vmatpush1.msra.mxu0 0.0
    %1521 = vmatprep.subr.mxu0 0.0
    %1522 = vmatpush1.msra.mxu0 0.0
    %1523 = vmatprep.subr.mxu0 0.0
    %1524 = vmatpush1.msra.mxu0 0.0
    %1525 = vmatprep.subr.mxu0 0.0
    %1526 = vmatpush1.msra.mxu0 0.0
    %1527 = vmatprep.subr.mxu0 0.0
    %1528 = vmatpush1.msra.mxu0 0.0
    %1529 = vmatprep.subr.mxu0 0.0
    %1530 = vmatpush1.msra.mxu0 0.0
    %1531 = vmatprep.subr.mxu0 0.0
    %1532 = vmatpush1.msra.mxu0 0.0
    %1533 = vmatprep.subr.mxu0 0.0
    %1534 = vmatpush1.msra.mxu0 0.0
    %1535 = vmatprep.subr.mxu0 0.0
    %1536 = vmatpush1.msra.mxu0 0.0
    %1537 = vmatprep.mubr.f32.mxu0 0.0
    %1538 = vmatmul.mubr.f32.gmra.mrb[0].mxu0 %v1263
    %v1539 = vpop.f32.mrb[0].mxu0
    %v1540 = vadd.f32 0.0, %v1539
    %v1541 = vpop.f32.mrb[0].mxu0
    %1542 = vmatprep.mubr.f32.mxu0 0.0
    %1543 = vmatmul.mubr.f32.gmra.mrb[0].mxu0 %v1266
    %v1544 = vpop.f32.mrb[0].mxu0
    %v1545 = vadd.f32 0.0, %v1544
    %v1546 = vpop.f32.mrb[0].mxu0
    %1547 = vdwg.mxu0
    %v1548 = vadd.f32 %v1454, %v1540
    %v1549 = vadd.f32 %v1455, %v1545
    %v1550 = vmax.f32 %v1548, 0.0
    %v1551 = vmax.f32 %v1549, 0.0
    %v1552 = vadd.f32 %v1550, %v1551
    %v1553 = vrot.slane %v1552, 4
    %v1554 = vadd.f32 %v1552, %v1553
    %v1555 = vrot.slane %v1554, 2
    %v1556 = vadd.f32 %v1554, %v1555
    %v1557 = vrot.slane %v1556, 1
    %v1558 = vadd.f32 %v1556, %v1557
    %v1559 = vld [vmem:[%s12] sm:$0xff]
    %v1560 = vld [vmem:[%s12 + $0x8] sm:$0xff]
    %v1561 = vld [vmem:[%s12 + $0x10] sm:$0xff]
    %v1562 = vld [vmem:[%s12 + $0x18] sm:$0xff]
    %v1563 = vld [vmem:[%s12 + $0x20] sm:$0xff]
    %v1564 = vld [vmem:[%s12 + $0x28] sm:$0xff]
    %v1565 = vld [vmem:[%s12 + $0x30] sm:$0xff]
    %v1566 = vld [vmem:[%s12 + $0x38] sm:$0xff]
    %v1567 = vld [vmem:[%s12 + $0x40] sm:$0xff]
    %v1568 = vld [vmem:[%s12 + $0x48] sm:$0xff]
    %v1569 = vld [vmem:[%s12 + $0x50] sm:$0xff]
    %v1570 = vld [vmem:[%s12 + $0x58] sm:$0xff]
    %v1571 = vld [vmem:[%s12 + $0x60] sm:$0xff]
    %v1572 = vld [vmem:[%s12 + $0x68] sm:$0xff]
    %v1573 = vld [vmem:[%s12 + $0x70] sm:$0xff]
    %v1574 = vld [vmem:[%s12 + $0x78] sm:$0xff]
    %v1575 = vld [vmem:[#allocation2] sm:$0x1]
    %1576 = vmatprep.subr.mxu0 0.0
    %1577 = vmatpush1.msra.mxu0 %v1559
    %1578 = vmatprep.subr.mxu0 0.0
    %1579 = vmatpush1.msra.mxu0 %v1560
    %1580 = vmatprep.subr.mxu0 0.0
    %1581 = vmatpush1.msra.mxu0 %v1561
    %1582 = vmatprep.subr.mxu0 0.0
    %1583 = vmatpush1.msra.mxu0 %v1562
    %1584 = vmatprep.subr.mxu0 0.0
    %1585 = vmatpush1.msra.mxu0 %v1563
    %1586 = vmatprep.subr.mxu0 0.0
    %1587 = vmatpush1.msra.mxu0 %v1564
    %1588 = vmatprep.subr.mxu0 0.0
    %1589 = vmatpush1.msra.mxu0 %v1565
    %1590 = vmatprep.subr.mxu0 0.0
    %1591 = vmatpush1.msra.mxu0 %v1566
    %1592 = vmatprep.subr.mxu0 0.0
    %1593 = vmatpush1.msra.mxu0 %v1567
    %1594 = vmatprep.subr.mxu0 0.0
    %1595 = vmatpush1.msra.mxu0 %v1568
    %1596 = vmatprep.subr.mxu0 0.0
    %1597 = vmatpush1.msra.mxu0 %v1569
    %1598 = vmatprep.subr.mxu0 0.0
    %1599 = vmatpush1.msra.mxu0 %v1570
    %1600 = vmatprep.subr.mxu0 0.0
    %1601 = vmatpush1.msra.mxu0 %v1571
    %1602 = vmatprep.subr.mxu0 0.0
    %1603 = vmatpush1.msra.mxu0 %v1572
    %1604 = vmatprep.subr.mxu0 0.0
    %1605 = vmatpush1.msra.mxu0 %v1573
    %1606 = vmatprep.subr.mxu0 0.0
    %1607 = vmatpush1.msra.mxu0 %v1574
    %1608 = vmatprep.subr.mxu0 0.0
    %1609 = vmatpush1.msra.mxu0 0.0
    %1610 = vmatprep.subr.mxu0 0.0
    %1611 = vmatpush1.msra.mxu0 0.0
    %1612 = vmatprep.subr.mxu0 0.0
    %1613 = vmatpush1.msra.mxu0 0.0
    %1614 = vmatprep.subr.mxu0 0.0
    %1615 = vmatpush1.msra.mxu0 0.0
    %1616 = vmatprep.subr.mxu0 0.0
    %1617 = vmatpush1.msra.mxu0 0.0
    %1618 = vmatprep.subr.mxu0 0.0
    %1619 = vmatpush1.msra.mxu0 0.0
    %1620 = vmatprep.subr.mxu0 0.0
    %1621 = vmatpush1.msra.mxu0 0.0
    %1622 = vmatprep.subr.mxu0 0.0
    %1623 = vmatpush1.msra.mxu0 0.0
    %1624 = vmatprep.subr.mxu0 0.0
    %1625 = vmatpush1.msra.mxu0 0.0
    %1626 = vmatprep.subr.mxu0 0.0
    %1627 = vmatpush1.msra.mxu0 0.0
    %1628 = vmatprep.subr.mxu0 0.0
    %1629 = vmatpush1.msra.mxu0 0.0
    %1630 = vmatprep.subr.mxu0 0.0
    %1631 = vmatpush1.msra.mxu0 0.0
    %1632 = vmatprep.subr.mxu0 0.0
    %1633 = vmatpush1.msra.mxu0 0.0
    %1634 = vmatprep.subr.mxu0 0.0
    %1635 = vmatpush1.msra.mxu0 0.0
    %1636 = vmatprep.subr.mxu0 0.0
    %1637 = vmatpush1.msra.mxu0 0.0
    %1638 = vmatprep.subr.mxu0 0.0
    %1639 = vmatpush1.msra.mxu0 0.0
    %1640 = vmatprep.mubr.f32.mxu0 0.0
    %1641 = vmatmul.mubr.f32.gmra.mrb[0].mxu0 %v1558
    %v1642 = vpop.f32.mrb[0].mxu0
    %v1643 = vadd.f32 %v1575, %v1642
    %v1644 = vpop.f32.mrb[0].mxu0
    %1645 = vdwg.mxu0
    %vm1646 = vcmask 0
    %1647 = vst.msk [vmem:[#allocation12] sm:$0x1] %vm1646, %v1643
    // Predicated region
    $region78: #{model_forward.1} parent=1 // pred_check
      _
    $region79: #{model_forward.1} parent=1 // pred_check_branch
      %1649 = sbr.rel (0) target = $region81
    $region80: #{model_forward.1} parent=1 // pred_region
      %s1651 = ssub.s32 16, 16
      %1652 = vsyncadd [#allocation5], %s1651
      %s1654 = sshll.u32 [#allocation12], 4
      %s1655 = int_to_ptr.vmem [resolvable:$true] %s1654
      %1657 = dma.vmem_to_hbm [thread:$0]  %s1655, 16, %s14, [#allocation5]
    $region81: #{model_forward.1} parent=1 // pred_fallthru
      _
    // Predicated region
    $region82: #{model_forward.1} parent=1 // pred_check
      _
    $region83: #{model_forward.1} parent=1 // pred_check_branch
      %1659 = sbr.rel (0) target = $region85
    $region84: #{model_forward.1} parent=1 // pred_region
      %1660 = dma.done [#allocation5], 16
    $region85: #{model_forward.1} parent=1 // pred_fallthru
      _
    %1661 = vsyncpa [#allocation4], 1
    %1662 = vsyncpa [#allocation7], 1
    %1663 = vsyncpa [#allocation10], 1
    %1664 = vsyncpa [#allocation5], 1

</llo_original>
